<compile_context>
chip_gen: v5e
topology: v5e:2x2
jax: 0.10.0
libtpu: 0.0.40
codegen_flags: <defaults>
</compile_context>

<pallas_src>
import jax
import jax.numpy as jnp
import numpy as np
from jax import lax
from jax.experimental import pallas as pl
from jax.experimental.pallas import tpu as pltpu


def _lstm_chunk_kernel(nchunks_ref, x_ref, len_ref, wih_ref, whh_ref, bias_ref,
                       out_ref, h_sc, c_sc):
    """Grid = (batch_blocks, time_chunks); runs K timesteps per grid step.

    x_ref   : (K, BB, D)   f32  streamed raw-input chunk (time-major)
    len_ref : (BB, 1)      i32  sequence lengths (resident)
    wih_ref : (D, 4*Hp)    f32  gate-major input weights (resident)
    whh_ref : (Hp, 4*Hp)   f32  gate-major recurrent weights (resident)
    bias_ref: (1, 4*Hp)    f32  fused bias b_ih + b_hh (resident)
    """
    b_blk = pl.program_id(0)
    t_blk = pl.program_id(1)
    n_t = pl.num_programs(1)
    K = x_ref.shape[0]
    Hp = h_sc.shape[-1]

    @pl.when(t_blk == 0)
    def _():
        h_sc[...] = jnp.zeros_like(h_sc)
        c_sc[...] = jnp.zeros_like(c_sc)

    # Skip chunks that are entirely past every sequence in this batch block
    # (lengths ragged / sorted descending -> trailing chunks are pure padding).
    @pl.when(t_blk < nchunks_ref[b_blk])
    def _():
        lens = len_ref[...]          # (BB, 1) int32 (fetched once per chunk)
        bias = bias_ref[...]         # (1, 4*Hp) f32

        def step(k, carry):
            h, c = carry
            t_glob = t_blk * K + k
            x_t = x_ref[k]           # (BB, D)
            # gates = x_t @ W_ih^T + h @ W_hh^T + (b_ih + b_hh)
            # (both dots F32 x F32 -> F32; weights consumed straight from VMEM
            #  refs to avoid vreg spills under the unrolled loop)
            gates = (jnp.dot(x_t, wih_ref[...],
                             preferred_element_type=jnp.float32)
                     + jnp.dot(h, whh_ref[...],
                               preferred_element_type=jnp.float32)
                     + bias)
            # PyTorch gate order i, f, g, o; each gate occupies a lane-aligned
            # Hp-wide (multiple of 128) slice.
            i = jax.nn.sigmoid(gates[:, 0 * Hp:1 * Hp])
            f = jax.nn.sigmoid(gates[:, 1 * Hp:2 * Hp])
            g = jnp.tanh(gates[:, 2 * Hp:3 * Hp])
            o = jax.nn.sigmoid(gates[:, 3 * Hp:4 * Hp])
            c_new = f * c + i * g
            h_new = o * jnp.tanh(c_new)
            m = t_glob < lens        # (BB, 1) bool: packed-sequence update mask
            return jnp.where(m, h_new, h), jnp.where(m, c_new, c)

        h, c = lax.fori_loop(0, K, step, (h_sc[...], c_sc[...]), unroll=True)
        h_sc[...] = h
        c_sc[...] = c

    @pl.when(t_blk == n_t - 1)
    def _():
        out_ref[...] = h_sc[...].astype(out_ref.dtype)


def _tpu_vmem_capacity_bytes():
    try:
        return int(pltpu.get_tpu_info().vmem_capacity_bytes)
    except Exception:
        return 64 * 1024 * 1024  # conservative fallback (v7x per-TC size)


def _default_batch_block(B):
    """Split the batch across TensorCores only on multi-core chips (v7x)."""
    ncores = 1
    try:
        info = pltpu.get_tpu_info()
        ncores = int(getattr(info, "num_cores",
                             getattr(info, "num_tensorcores", 1)) or 1)
    except Exception:
        ncores = 1
    if ncores >= 2 and B >= 16 and B % ncores == 0 and (B // ncores) % 8 == 0:
        return B // ncores
    return B


def _vmem_limit_bytes(K, BB, D, Hp):
    G = 4 * Hp
    stream = 2 * K * BB * D * 4              # double-buffered raw-x chunks
    weights = 2 * (D * G + Hp * G + G) * 4   # W_ih, W_hh, bias (f32, 2 bufs)
    small = 2 * (BB * 4 + BB * Hp * 4)       # lengths + output blocks
    scratch = 2 * BB * Hp * 4                # h, c scratch
    budget = 4 * (stream + weights + small + scratch)
    hi = (_tpu_vmem_capacity_bytes() * 3) // 4   # leave headroom for XLA
    return int(min(max(budget, 16 * 1024 * 1024), max(hi, 16 * 1024 * 1024)))


def lstm_last_hidden(x, lengths, w_ih, w_hh, b_ih, b_hh, *, time_chunk=8,
                     batch_block=None):
    """x: (B, T, D) float32 (batch_first), lengths: (B,) int (like
    pack_padded_sequence, enforce_sorted=True; must satisfy 1 <= len <= T).
    Returns (B, H) float32 == dropout_eval(h_n[-1])."""
    B, T, D = x.shape
    H = w_hh.shape[1]
    Hp = ((H + 127) // 128) * 128        # lane-aligned per-gate width
    G = 4 * Hp
    BB = _default_batch_block(B) if batch_block is None else batch_block
    assert B % BB == 0
    assert BB == B or BB % 8 == 0, "batch_block must be B or a multiple of 8"
    assert time_chunk % 8 == 0
    K = T if T <= time_chunk else time_chunk
    T_pad = pl.cdiv(T, K) * K
    n_bblk = B // BB
    n_tblk = T_pad // K

    f32 = jnp.float32

    # --- Re-layout weights gate-major with per-gate width padded to Hp. -----
    # w_ih: (4H, D) -> (D, 4*Hp); w_hh: (4H, H) -> (Hp, 4*Hp); bias -> (1, 4*Hp)
    # Zero padding keeps the padded hidden lanes exactly zero through the
    # recurrence (i=f=o=sigmoid(0), g=tanh(0)=0 -> c,h stay 0 on padded lanes).
    w_ih_g = jnp.pad(w_ih.astype(f32).reshape(4, H, D),
                     ((0, 0), (0, Hp - H), (0, 0)))
    wih_p = jnp.transpose(w_ih_g, (2, 0, 1)).reshape(D, G)
    w_hh_g = jnp.pad(w_hh.astype(f32).reshape(4, H, H),
                     ((0, 0), (0, Hp - H), (0, Hp - H)))
    whh_p = jnp.transpose(w_hh_g, (2, 0, 1)).reshape(Hp, G)
    bias_p = jnp.pad((b_ih + b_hh).astype(f32).reshape(4, H),
                     ((0, 0), (0, Hp - H))).reshape(1, G)

    # --- Time-major raw-x stream (tiny copy; the huge xW stream is gone). ---
    x_t = jnp.transpose(x.astype(f32), (1, 0, 2))                 # (T, B, D)
    x_t = jnp.pad(x_t, ((0, T_pad - T), (0, 0), (0, 0)))          # (T_pad,B,D)

    lengths_i = jnp.asarray(lengths, jnp.int32)
    lengths2d = lengths_i.reshape(B, 1)

    # Per batch block: number of time chunks actually containing valid steps.
    maxlen_blk = jnp.max(lengths_i.reshape(n_bblk, BB), axis=1)
    nchunks = jnp.maximum((maxlen_blk + K - 1) // K, 1).astype(jnp.int32)

    h_pad = pl.pallas_call(
        _lstm_chunk_kernel,
        out_shape=jax.ShapeDtypeStruct((B, Hp), f32),
        grid_spec=pltpu.PrefetchScalarGridSpec(
            num_scalar_prefetch=1,
            grid=(n_bblk, n_tblk),
            in_specs=[
                # Raw x chunk; clamp the time index so fully-masked trailing
                # chunks re-use the last needed block (DMA skipped).
                pl.BlockSpec((K, BB, D),
                             lambda b, t, nc: (jnp.minimum(t, nc[b] - 1), b, 0)),
                pl.BlockSpec((BB, 1), lambda b, t, nc: (b, 0)),    # lengths
                pl.BlockSpec((D, G), lambda b, t, nc: (0, 0)),     # W_ih
                pl.BlockSpec((Hp, G), lambda b, t, nc: (0, 0)),    # W_hh
                pl.BlockSpec((1, G), lambda b, t, nc: (0, 0)),     # bias
            ],
            out_specs=pl.BlockSpec((BB, Hp), lambda b, t, nc: (b, 0)),
            scratch_shapes=[pltpu.VMEM((BB, Hp), f32),
                            pltpu.VMEM((BB, Hp), f32)],
        ),
        compiler_params=pltpu.CompilerParams(
            dimension_semantics=("parallel", "arbitrary"),
            vmem_limit_bytes=_vmem_limit_bytes(K, BB, D, Hp),
        ),
    )(nchunks, x_t, lengths2d, wih_p, whh_p, bias_p)

    # Drop padded hidden lanes.  Dropout in eval mode is identity.
    return h_pad[:, :H]


def lstm_ref(x, lengths, w_ih, w_hh, b_ih, b_hh):
    """Pure-JAX f32 reference (same math as nn.LSTM + packed last hidden)."""
    B, T, D = x.shape
    H = w_hh.shape[1]

    def step(carry, inp):
        h, c = carry
        x_t, m = inp
        gates = x_t @ w_ih.T + h @ w_hh.T + b_ih + b_hh
        i, f, g, o = jnp.split(gates, 4, axis=-1)
        i, f, g, o = (jax.nn.sigmoid(i), jax.nn.sigmoid(f), jnp.tanh(g),
                      jax.nn.sigmoid(o))
        c_new = f * c + i * g
        h_new = o * jnp.tanh(c_new)
        m = m[:, None]
        return (jnp.where(m > 0, h_new, h), jnp.where(m > 0, c_new, c)), None

    mask = (jnp.arange(T)[:, None] < lengths[None, :]).astype(jnp.float32)
    (h, _), _ = jax.lax.scan(
        step,
        (jnp.zeros((B, H), jnp.float32), jnp.zeros((B, H), jnp.float32)),
        (jnp.transpose(x, (1, 0, 2)), mask),
    )
    return h


if __name__ == "__main__":
    B, T, D, H = 2, 8, 4, 32          # batch, seq, input_dim, hidden_dim

    key = jax.random.PRNGKey(0)
    k_x, k_wih, k_whh, k_bih, k_bhh = jax.random.split(key, 5)

    # Same shapes / init range as nn.LSTM (uniform(-1/sqrt(H), 1/sqrt(H));
    # gate order i, f, g, o).
    bound = 1.0 / float(np.sqrt(H))
    w_ih = jax.random.uniform(k_wih, (4 * H, D), jnp.float32, -bound, bound)
    w_hh = jax.random.uniform(k_whh, (4 * H, H), jnp.float32, -bound, bound)
    b_ih = jax.random.uniform(k_bih, (4 * H,), jnp.float32, -bound, bound)
    b_hh = jax.random.uniform(k_bhh, (4 * H,), jnp.float32, -bound, bound)

    sentences = jax.random.normal(k_x, (B, T, D), jnp.float32)   # (B, T, D)
    lengths = jnp.array([8, 5], dtype=jnp.int32)                 # sorted desc

    out = lstm_last_hidden(sentences, lengths, w_ih, w_hh, b_ih, b_hh)
    out = jax.block_until_ready(out)

    ref = lstm_ref(sentences, lengths, w_ih, w_hh, b_ih, b_hh)
    np.testing.assert_allclose(np.asarray(out), np.asarray(ref),
                               rtol=1e-2, atol=1e-3)

    print("KERNEL_OK")
</pallas_src>

<mosaic_0001>
module attributes {stable_mosaic.version = 11 : i64} {
  func.func @_lstm_chunk_kernel(%arg0: i32, %arg1: i32, %arg2: memref<1xi32, #tpu.memory_space<smem>>, %arg3: memref<8x2x4xf32, #tpu.memory_space<vmem>>, %arg4: memref<2x1xi32, #tpu.memory_space<vmem>>, %arg5: memref<4x512xf32, #tpu.memory_space<vmem>>, %arg6: memref<128x512xf32, #tpu.memory_space<vmem>>, %arg7: memref<1x512xf32, #tpu.memory_space<vmem>>, %arg8: memref<2x128xf32, #tpu.memory_space<vmem>>, %arg9: memref<2x128xf32, #tpu.memory_space<vmem>>, %arg10: memref<2x128xf32, #tpu.memory_space<vmem>>) attributes {dimension_semantics = [#tpu.dimension_semantics<parallel>, #tpu.dimension_semantics<arbitrary>], iteration_bounds = array<i64: 1, 1>, scalar_prefetch = 1 : i64, scratch_operands = 2 : i64, tpu.core_type = #tpu.core_type<tc>, window_params = [{transform_indices = @transform_0, window_bounds = array<i64: 8, 2, 4>}, {transform_indices = @transform_1, window_bounds = array<i64: 2, 1>}, {pipeline_mode = #tpu.pipeline_mode<synchronous>, transform_indices = @transform_2, window_bounds = array<i64: 4, 512>}, {pipeline_mode = #tpu.pipeline_mode<synchronous>, transform_indices = @transform_3, window_bounds = array<i64: 128, 512>}, {pipeline_mode = #tpu.pipeline_mode<synchronous>, transform_indices = @transform_4, window_bounds = array<i64: 1, 512>}, {transform_indices = @transform_5, window_bounds = array<i64: 2, 128>}]} {
    %c0_i32 = arith.constant 0 : i32
    %0 = arith.cmpi eq, %arg1, %c0_i32 : i32
    %1 = arith.extui %0 : i1 to i32
    %c0_i32_0 = arith.constant 0 : i32
    %2 = arith.cmpi ne, %1, %c0_i32_0 : i32
    scf.if %2 {
      %cst = arith.constant 0.000000e+00 : f32
      %11 = vector.broadcast %cst : f32 to vector<2x128xf32>
      %c0 = arith.constant 0 : index
      %c0_4 = arith.constant 0 : index
      %12 = vector.load %arg9[%c0, %c0_4] : memref<2x128xf32, #tpu.memory_space<vmem>>, vector<2x128xf32>
      tpu.vector_store %arg9[%c0, %c0_4], %11 {strides = array<i32>} : memref<2x128xf32, #tpu.memory_space<vmem>>, vector<2x128xf32>,
      %cst_5 = arith.constant 0.000000e+00 : f32
      %13 = vector.broadcast %cst_5 : f32 to vector<2x128xf32>
      %c0_6 = arith.constant 0 : index
      %c0_7 = arith.constant 0 : index
      %14 = vector.load %arg10[%c0_6, %c0_7] : memref<2x128xf32, #tpu.memory_space<vmem>>, vector<2x128xf32>
      tpu.vector_store %arg10[%c0_6, %c0_7], %13 {strides = array<i32>} : memref<2x128xf32, #tpu.memory_space<vmem>>, vector<2x128xf32>,
    } else {
    }
    %3 = arith.index_cast %arg0 : i32 to index
    %4 = memref.load %arg2[%3] : memref<1xi32, #tpu.memory_space<smem>>
    %5 = arith.cmpi slt, %arg1, %4 : i32
    %6 = arith.extui %5 : i1 to i32
    %c0_i32_1 = arith.constant 0 : i32
    %7 = arith.cmpi ne, %6, %c0_i32_1 : i32
    scf.if %7 {
      %c0 = arith.constant 0 : index
      %c0_4 = arith.constant 0 : index
      %11 = vector.load %arg4[%c0, %c0_4] : memref<2x1xi32, #tpu.memory_space<vmem>>, vector<2x1xi32>
      %c0_5 = arith.constant 0 : index
      %c0_6 = arith.constant 0 : index
      %12 = vector.load %arg7[%c0_5, %c0_6] : memref<1x512xf32, #tpu.memory_space<vmem>>, vector<1x512xf32>
      %c0_7 = arith.constant 0 : index
      %c0_8 = arith.constant 0 : index
      %13 = vector.load %arg9[%c0_7, %c0_8] : memref<2x128xf32, #tpu.memory_space<vmem>>, vector<2x128xf32>
      %c0_9 = arith.constant 0 : index
      %c0_10 = arith.constant 0 : index
      %14 = vector.load %arg10[%c0_9, %c0_10] : memref<2x128xf32, #tpu.memory_space<vmem>>, vector<2x128xf32>
      %c0_i32_11 = arith.constant 0 : i32
      %c8_i32 = arith.constant 8 : i32
      %15 = arith.muli %arg1, %c8_i32 : i32
      %16 = arith.addi %15, %c0_i32_11 : i32
      %17 = arith.index_cast %c0_i32_11 : i32 to index
      %c0_12 = arith.constant 0 : index
      %c0_13 = arith.constant 0 : index
      %18 = vector.load %arg3[%17, %c0_12, %c0_13] : memref<8x2x4xf32, #tpu.memory_space<vmem>>, vector<1x2x4xf32>
      %19 = vector.shape_cast %18 : vector<1x2x4xf32> to vector<2x4xf32>
      %c0_14 = arith.constant 0 : index
      %c0_15 = arith.constant 0 : index
      %20 = vector.load %arg5[%c0_14, %c0_15] : memref<4x512xf32, #tpu.memory_space<vmem>>, vector<4x512xf32>
      %cst = arith.constant dense<0.000000e+00> : vector<2x512xf32>
      %21 = tpu.matmul %19, %20, %cst {dimension_numbers = #tpu.dot_dimension_numbers<[1], [0], [0], [1], [0, 0, 1, 1], [], []>} : vector<2x4xf32>, vector<4x512xf32>, vector<2x512xf32> -> vector<2x512xf32>
      %c0_16 = arith.constant 0 : index
      %c0_17 = arith.constant 0 : index
      %22 = vector.load %arg6[%c0_16, %c0_17] : memref<128x512xf32, #tpu.memory_space<vmem>>, vector<128x512xf32>
      %cst_18 = arith.constant dense<0.000000e+00> : vector<2x512xf32>
      %23 = tpu.matmul %13, %22, %cst_18 {dimension_numbers = #tpu.dot_dimension_numbers<[1], [0], [0], [1], [0, 0, 1, 1], [], []>} : vector<2x128xf32>, vector<128x512xf32>, vector<2x512xf32> -> vector<2x512xf32>
      %24 = arith.addf %21, %23 : vector<2x512xf32>
      %25 = vector.broadcast %12 : vector<1x512xf32> to vector<2x512xf32>
      %26 = arith.addf %24, %25 : vector<2x512xf32>
      %27 = vector.extract_strided_slice %26 {offsets = [0, 0], sizes = [2, 128], strides = [1, 1]} : vector<2x512xf32> to vector<2x128xf32>
      %28 = arith.negf %27 : vector<2x128xf32>
      %29 = math.exp %28 : vector<2x128xf32>
      %cst_19 = arith.constant 1.000000e+00 : f32
      %30 = vector.broadcast %cst_19 : f32 to vector<2x128xf32>
      %31 = arith.addf %30, %29 : vector<2x128xf32>
      %32 = arith.divf %30, %31 : vector<2x128xf32>
      %33 = vector.extract_strided_slice %26 {offsets = [0, 128], sizes = [2, 128], strides = [1, 1]} : vector<2x512xf32> to vector<2x128xf32>
      %34 = arith.negf %33 : vector<2x128xf32>
      %35 = math.exp %34 : vector<2x128xf32>
      %cst_20 = arith.constant 1.000000e+00 : f32
      %36 = vector.broadcast %cst_20 : f32 to vector<2x128xf32>
      %37 = arith.addf %36, %35 : vector<2x128xf32>
      %38 = arith.divf %36, %37 : vector<2x128xf32>
      %39 = vector.extract_strided_slice %26 {offsets = [0, 256], sizes = [2, 128], strides = [1, 1]} : vector<2x512xf32> to vector<2x128xf32>
      %40 = math.tanh %39 : vector<2x128xf32>
      %41 = vector.extract_strided_slice %26 {offsets = [0, 384], sizes = [2, 128], strides = [1, 1]} : vector<2x512xf32> to vector<2x128xf32>
      %42 = arith.negf %41 : vector<2x128xf32>
      %43 = math.exp %42 : vector<2x128xf32>
      %cst_21 = arith.constant 1.000000e+00 : f32
      %44 = vector.broadcast %cst_21 : f32 to vector<2x128xf32>
      %45 = arith.addf %44, %43 : vector<2x128xf32>
      %46 = arith.divf %44, %45 : vector<2x128xf32>
      %47 = arith.mulf %38, %14 : vector<2x128xf32>
      %48 = arith.mulf %32, %40 : vector<2x128xf32>
      %49 = arith.addf %47, %48 : vector<2x128xf32>
      %50 = math.tanh %49 : vector<2x128xf32>
      %51 = arith.mulf %46, %50 : vector<2x128xf32>
      %52 = vector.broadcast %16 : i32 to vector<2x1xi32>
      %53 = arith.cmpi slt, %52, %11 : vector<2x1xi32>
      %54 = vector.shape_cast %53 : vector<2x1xi1> to vector<2x1xi1>
      %55 = vector.broadcast %54 : vector<2x1xi1> to vector<2x128xi1>
      %56 = arith.select %55, %51, %13 : vector<2x128xi1>, vector<2x128xf32>
      %57 = vector.shape_cast %53 : vector<2x1xi1> to vector<2x1xi1>
      %58 = vector.broadcast %57 : vector<2x1xi1> to vector<2x128xi1>
      %59 = arith.select %58, %49, %14 : vector<2x128xi1>, vector<2x128xf32>
      %c1_i32 = arith.constant 1 : i32
      %c8_i32_22 = arith.constant 8 : i32
      %60 = arith.muli %arg1, %c8_i32_22 : i32
      %61 = arith.addi %60, %c1_i32 : i32
      %62 = arith.index_cast %c1_i32 : i32 to index
      %c0_23 = arith.constant 0 : index
      %c0_24 = arith.constant 0 : index
      %63 = vector.load %arg3[%62, %c0_23, %c0_24] : memref<8x2x4xf32, #tpu.memory_space<vmem>>, vector<1x2x4xf32>
      %64 = vector.shape_cast %63 : vector<1x2x4xf32> to vector<2x4xf32>
      %c0_25 = arith.constant 0 : index
      %c0_26 = arith.constant 0 : index
      %65 = vector.load %arg5[%c0_25, %c0_26] : memref<4x512xf32, #tpu.memory_space<vmem>>, vector<4x512xf32>
      %cst_27 = arith.constant dense<0.000000e+00> : vector<2x512xf32>
      %66 = tpu.matmul %64, %65, %cst_27 {dimension_numbers = #tpu.dot_dimension_numbers<[1], [0], [0], [1], [0, 0, 1, 1], [], []>} : vector<2x4xf32>, vector<4x512xf32>, vector<2x512xf32> -> vector<2x512xf32>
      %c0_28 = arith.constant 0 : index
      %c0_29 = arith.constant 0 : index
      %67 = vector.load %arg6[%c0_28, %c0_29] : memref<128x512xf32, #tpu.memory_space<vmem>>, vector<128x512xf32>
      %cst_30 = arith.constant dense<0.000000e+00> : vector<2x512xf32>
      %68 = tpu.matmul %56, %67, %cst_30 {dimension_numbers = #tpu.dot_dimension_numbers<[1], [0], [0], [1], [0, 0, 1, 1], [], []>} : vector<2x128xf32>, vector<128x512xf32>, vector<2x512xf32> -> vector<2x512xf32>
      %69 = arith.addf %66, %68 : vector<2x512xf32>
      %70 = vector.broadcast %12 : vector<1x512xf32> to vector<2x512xf32>
      %71 = arith.addf %69, %70 : vector<2x512xf32>
      %72 = vector.extract_strided_slice %71 {offsets = [0, 0], sizes = [2, 128], strides = [1, 1]} : vector<2x512xf32> to vector<2x128xf32>
      %73 = arith.negf %72 : vector<2x128xf32>
      %74 = math.exp %73 : vector<2x128xf32>
      %cst_31 = arith.constant 1.000000e+00 : f32
      %75 = vector.broadcast %cst_31 : f32 to vector<2x128xf32>
      %76 = arith.addf %75, %74 : vector<2x128xf32>
      %77 = arith.divf %75, %76 : vector<2x128xf32>
      %78 = vector.extract_strided_slice %71 {offsets = [0, 128], sizes = [2, 128], strides = [1, 1]} : vector<2x512xf32> to vector<2x128xf32>
      %79 = arith.negf %78 : vector<2x128xf32>
      %80 = math.exp %79 : vector<2x128xf32>
      %cst_32 = arith.constant 1.000000e+00 : f32
      %81 = vector.broadcast %cst_32 : f32 to vector<2x128xf32>
      %82 = arith.addf %81, %80 : vector<2x128xf32>
      %83 = arith.divf %81, %82 : vector<2x128xf32>
      %84 = vector.extract_strided_slice %71 {offsets = [0, 256], sizes = [2, 128], strides = [1, 1]} : vector<2x512xf32> to vector<2x128xf32>
      %85 = math.tanh %84 : vector<2x128xf32>
      %86 = vector.extract_strided_slice %71 {offsets = [0, 384], sizes = [2, 128], strides = [1, 1]} : vector<2x512xf32> to vector<2x128xf32>
      %87 = arith.negf %86 : vector<2x128xf32>
      %88 = math.exp %87 : vector<2x128xf32>
      %cst_33 = arith.constant 1.000000e+00 : f32
      %89 = vector.broadcast %cst_33 : f32 to vector<2x128xf32>
      %90 = arith.addf %89, %88 : vector<2x128xf32>
      %91 = arith.divf %89, %90 : vector<2x128xf32>
      %92 = arith.mulf %83, %59 : vector<2x128xf32>
      %93 = arith.mulf %77, %85 : vector<2x128xf32>
      %94 = arith.addf %92, %93 : vector<2x128xf32>
      %95 = math.tanh %94 : vector<2x128xf32>
      %96 = arith.mulf %91, %95 : vector<2x128xf32>
      %97 = vector.broadcast %61 : i32 to vector<2x1xi32>
      %98 = arith.cmpi slt, %97, %11 : vector<2x1xi32>
      %99 = vector.shape_cast %98 : vector<2x1xi1> to vector<2x1xi1>
      %100 = vector.broadcast %99 : vector<2x1xi1> to vector<2x128xi1>
      %101 = arith.select %100, %96, %56 : vector<2x128xi1>, vector<2x128xf32>
      %102 = vector.shape_cast %98 : vector<2x1xi1> to vector<2x1xi1>
      %103 = vector.broadcast %102 : vector<2x1xi1> to vector<2x128xi1>
      %104 = arith.select %103, %94, %59 : vector<2x128xi1>, vector<2x128xf32>
      %c2_i32 = arith.constant 2 : i32
      %c8_i32_34 = arith.constant 8 : i32
      %105 = arith.muli %arg1, %c8_i32_34 : i32
      %106 = arith.addi %105, %c2_i32 : i32
      %107 = arith.index_cast %c2_i32 : i32 to index
      %c0_35 = arith.constant 0 : index
      %c0_36 = arith.constant 0 : index
      %108 = vector.load %arg3[%107, %c0_35, %c0_36] : memref<8x2x4xf32, #tpu.memory_space<vmem>>, vector<1x2x4xf32>
      %109 = vector.shape_cast %108 : vector<1x2x4xf32> to vector<2x4xf32>
      %c0_37 = arith.constant 0 : index
      %c0_38 = arith.constant 0 : index
      %110 = vector.load %arg5[%c0_37, %c0_38] : memref<4x512xf32, #tpu.memory_space<vmem>>, vector<4x512xf32>
      %cst_39 = arith.constant dense<0.000000e+00> : vector<2x512xf32>
      %111 = tpu.matmul %109, %110, %cst_39 {dimension_numbers = #tpu.dot_dimension_numbers<[1], [0], [0], [1], [0, 0, 1, 1], [], []>} : vector<2x4xf32>, vector<4x512xf32>, vector<2x512xf32> -> vector<2x512xf32>
      %c0_40 = arith.constant 0 : index
      %c0_41 = arith.constant 0 : index
      %112 = vector.load %arg6[%c0_40, %c0_41] : memref<128x512xf32, #tpu.memory_space<vmem>>, vector<128x512xf32>
      %cst_42 = arith.constant dense<0.000000e+00> : vector<2x512xf32>
      %113 = tpu.matmul %101, %112, %cst_42 {dimension_numbers = #tpu.dot_dimension_numbers<[1], [0], [0], [1], [0, 0, 1, 1], [], []>} : vector<2x128xf32>, vector<128x512xf32>, vector<2x512xf32> -> vector<2x512xf32>
      %114 = arith.addf %111, %113 : vector<2x512xf32>
      %115 = vector.broadcast %12 : vector<1x512xf32> to vector<2x512xf32>
      %116 = arith.addf %114, %115 : vector<2x512xf32>
      %117 = vector.extract_strided_slice %116 {offsets = [0, 0], sizes = [2, 128], strides = [1, 1]} : vector<2x512xf32> to vector<2x128xf32>
      %118 = arith.negf %117 : vector<2x128xf32>
      %119 = math.exp %118 : vector<2x128xf32>
      %cst_43 = arith.constant 1.000000e+00 : f32
      %120 = vector.broadcast %cst_43 : f32 to vector<2x128xf32>
      %121 = arith.addf %120, %119 : vector<2x128xf32>
      %122 = arith.divf %120, %121 : vector<2x128xf32>
      %123 = vector.extract_strided_slice %116 {offsets = [0, 128], sizes = [2, 128], strides = [1, 1]} : vector<2x512xf32> to vector<2x128xf32>
      %124 = arith.negf %123 : vector<2x128xf32>
      %125 = math.exp %124 : vector<2x128xf32>
      %cst_44 = arith.constant 1.000000e+00 : f32
      %126 = vector.broadcast %cst_44 : f32 to vector<2x128xf32>
      %127 = arith.addf %126, %125 : vector<2x128xf32>
      %128 = arith.divf %126, %127 : vector<2x128xf32>
      %129 = vector.extract_strided_slice %116 {offsets = [0, 256], sizes = [2, 128], strides = [1, 1]} : vector<2x512xf32> to vector<2x128xf32>
      %130 = math.tanh %129 : vector<2x128xf32>
      %131 = vector.extract_strided_slice %116 {offsets = [0, 384], sizes = [2, 128], strides = [1, 1]} : vector<2x512xf32> to vector<2x128xf32>
      %132 = arith.negf %131 : vector<2x128xf32>
      %133 = math.exp %132 : vector<2x128xf32>
      %cst_45 = arith.constant 1.000000e+00 : f32
      %134 = vector.broadcast %cst_45 : f32 to vector<2x128xf32>
      %135 = arith.addf %134, %133 : vector<2x128xf32>
      %136 = arith.divf %134, %135 : vector<2x128xf32>
      %137 = arith.mulf %128, %104 : vector<2x128xf32>
      %138 = arith.mulf %122, %130 : vector<2x128xf32>
      %139 = arith.addf %137, %138 : vector<2x128xf32>
      %140 = math.tanh %139 : vector<2x128xf32>
      %141 = arith.mulf %136, %140 : vector<2x128xf32>
      %142 = vector.broadcast %106 : i32 to vector<2x1xi32>
      %143 = arith.cmpi slt, %142, %11 : vector<2x1xi32>
      %144 = vector.shape_cast %143 : vector<2x1xi1> to vector<2x1xi1>
      %145 = vector.broadcast %144 : vector<2x1xi1> to vector<2x128xi1>
      %146 = arith.select %145, %141, %101 : vector<2x128xi1>, vector<2x128xf32>
      %147 = vector.shape_cast %143 : vector<2x1xi1> to vector<2x1xi1>
      %148 = vector.broadcast %147 : vector<2x1xi1> to vector<2x128xi1>
      %149 = arith.select %148, %139, %104 : vector<2x128xi1>, vector<2x128xf32>
      %c3_i32 = arith.constant 3 : i32
      %c8_i32_46 = arith.constant 8 : i32
      %150 = arith.muli %arg1, %c8_i32_46 : i32
      %151 = arith.addi %150, %c3_i32 : i32
      %152 = arith.index_cast %c3_i32 : i32 to index
      %c0_47 = arith.constant 0 : index
      %c0_48 = arith.constant 0 : index
      %153 = vector.load %arg3[%152, %c0_47, %c0_48] : memref<8x2x4xf32, #tpu.memory_space<vmem>>, vector<1x2x4xf32>
      %154 = vector.shape_cast %153 : vector<1x2x4xf32> to vector<2x4xf32>
      %c0_49 = arith.constant 0 : index
      %c0_50 = arith.constant 0 : index
      %155 = vector.load %arg5[%c0_49, %c0_50] : memref<4x512xf32, #tpu.memory_space<vmem>>, vector<4x512xf32>
      %cst_51 = arith.constant dense<0.000000e+00> : vector<2x512xf32>
      %156 = tpu.matmul %154, %155, %cst_51 {dimension_numbers = #tpu.dot_dimension_numbers<[1], [0], [0], [1], [0, 0, 1, 1], [], []>} : vector<2x4xf32>, vector<4x512xf32>, vector<2x512xf32> -> vector<2x512xf32>
      %c0_52 = arith.constant 0 : index
      %c0_53 = arith.constant 0 : index
      %157 = vector.load %arg6[%c0_52, %c0_53] : memref<128x512xf32, #tpu.memory_space<vmem>>, vector<128x512xf32>
      %cst_54 = arith.constant dense<0.000000e+00> : vector<2x512xf32>
      %158 = tpu.matmul %146, %157, %cst_54 {dimension_numbers = #tpu.dot_dimension_numbers<[1], [0], [0], [1], [0, 0, 1, 1], [], []>} : vector<2x128xf32>, vector<128x512xf32>, vector<2x512xf32> -> vector<2x512xf32>
      %159 = arith.addf %156, %158 : vector<2x512xf32>
      %160 = vector.broadcast %12 : vector<1x512xf32> to vector<2x512xf32>
      %161 = arith.addf %159, %160 : vector<2x512xf32>
      %162 = vector.extract_strided_slice %161 {offsets = [0, 0], sizes = [2, 128], strides = [1, 1]} : vector<2x512xf32> to vector<2x128xf32>
      %163 = arith.negf %162 : vector<2x128xf32>
      %164 = math.exp %163 : vector<2x128xf32>
      %cst_55 = arith.constant 1.000000e+00 : f32
      %165 = vector.broadcast %cst_55 : f32 to vector<2x128xf32>
      %166 = arith.addf %165, %164 : vector<2x128xf32>
      %167 = arith.divf %165, %166 : vector<2x128xf32>
      %168 = vector.extract_strided_slice %161 {offsets = [0, 128], sizes = [2, 128], strides = [1, 1]} : vector<2x512xf32> to vector<2x128xf32>
      %169 = arith.negf %168 : vector<2x128xf32>
      %170 = math.exp %169 : vector<2x128xf32>
      %cst_56 = arith.constant 1.000000e+00 : f32
      %171 = vector.broadcast %cst_56 : f32 to vector<2x128xf32>
      %172 = arith.addf %171, %170 : vector<2x128xf32>
      %173 = arith.divf %171, %172 : vector<2x128xf32>
      %174 = vector.extract_strided_slice %161 {offsets = [0, 256], sizes = [2, 128], strides = [1, 1]} : vector<2x512xf32> to vector<2x128xf32>
      %175 = math.tanh %174 : vector<2x128xf32>
      %176 = vector.extract_strided_slice %161 {offsets = [0, 384], sizes = [2, 128], strides = [1, 1]} : vector<2x512xf32> to vector<2x128xf32>
      %177 = arith.negf %176 : vector<2x128xf32>
      %178 = math.exp %177 : vector<2x128xf32>
      %cst_57 = arith.constant 1.000000e+00 : f32
      %179 = vector.broadcast %cst_57 : f32 to vector<2x128xf32>
      %180 = arith.addf %179, %178 : vector<2x128xf32>
      %181 = arith.divf %179, %180 : vector<2x128xf32>
      %182 = arith.mulf %173, %149 : vector<2x128xf32>
      %183 = arith.mulf %167, %175 : vector<2x128xf32>
      %184 = arith.addf %182, %183 : vector<2x128xf32>
      %185 = math.tanh %184 : vector<2x128xf32>
      %186 = arith.mulf %181, %185 : vector<2x128xf32>
      %187 = vector.broadcast %151 : i32 to vector<2x1xi32>
      %188 = arith.cmpi slt, %187, %11 : vector<2x1xi32>
      %189 = vector.shape_cast %188 : vector<2x1xi1> to vector<2x1xi1>
      %190 = vector.broadcast %189 : vector<2x1xi1> to vector<2x128xi1>
      %191 = arith.select %190, %186, %146 : vector<2x128xi1>, vector<2x128xf32>
      %192 = vector.shape_cast %188 : vector<2x1xi1> to vector<2x1xi1>
      %193 = vector.broadcast %192 : vector<2x1xi1> to vector<2x128xi1>
      %194 = arith.select %193, %184, %149 : vector<2x128xi1>, vector<2x128xf32>
      %c4_i32 = arith.constant 4 : i32
      %c8_i32_58 = arith.constant 8 : i32
      %195 = arith.muli %arg1, %c8_i32_58 : i32
      %196 = arith.addi %195, %c4_i32 : i32
      %197 = arith.index_cast %c4_i32 : i32 to index
      %c0_59 = arith.constant 0 : index
      %c0_60 = arith.constant 0 : index
      %198 = vector.load %arg3[%197, %c0_59, %c0_60] : memref<8x2x4xf32, #tpu.memory_space<vmem>>, vector<1x2x4xf32>
      %199 = vector.shape_cast %198 : vector<1x2x4xf32> to vector<2x4xf32>
      %c0_61 = arith.constant 0 : index
      %c0_62 = arith.constant 0 : index
      %200 = vector.load %arg5[%c0_61, %c0_62] : memref<4x512xf32, #tpu.memory_space<vmem>>, vector<4x512xf32>
      %cst_63 = arith.constant dense<0.000000e+00> : vector<2x512xf32>
      %201 = tpu.matmul %199, %200, %cst_63 {dimension_numbers = #tpu.dot_dimension_numbers<[1], [0], [0], [1], [0, 0, 1, 1], [], []>} : vector<2x4xf32>, vector<4x512xf32>, vector<2x512xf32> -> vector<2x512xf32>
      %c0_64 = arith.constant 0 : index
      %c0_65 = arith.constant 0 : index
      %202 = vector.load %arg6[%c0_64, %c0_65] : memref<128x512xf32, #tpu.memory_space<vmem>>, vector<128x512xf32>
      %cst_66 = arith.constant dense<0.000000e+00> : vector<2x512xf32>
      %203 = tpu.matmul %191, %202, %cst_66 {dimension_numbers = #tpu.dot_dimension_numbers<[1], [0], [0], [1], [0, 0, 1, 1], [], []>} : vector<2x128xf32>, vector<128x512xf32>, vector<2x512xf32> -> vector<2x512xf32>
      %204 = arith.addf %201, %203 : vector<2x512xf32>
      %205 = vector.broadcast %12 : vector<1x512xf32> to vector<2x512xf32>
      %206 = arith.addf %204, %205 : vector<2x512xf32>
      %207 = vector.extract_strided_slice %206 {offsets = [0, 0], sizes = [2, 128], strides = [1, 1]} : vector<2x512xf32> to vector<2x128xf32>
      %208 = arith.negf %207 : vector<2x128xf32>
      %209 = math.exp %208 : vector<2x128xf32>
      %cst_67 = arith.constant 1.000000e+00 : f32
      %210 = vector.broadcast %cst_67 : f32 to vector<2x128xf32>
      %211 = arith.addf %210, %209 : vector<2x128xf32>
      %212 = arith.divf %210, %211 : vector<2x128xf32>
      %213 = vector.extract_strided_slice %206 {offsets = [0, 128], sizes = [2, 128], strides = [1, 1]} : vector<2x512xf32> to vector<2x128xf32>
      %214 = arith.negf %213 : vector<2x128xf32>
      %215 = math.exp %214 : vector<2x128xf32>
      %cst_68 = arith.constant 1.000000e+00 : f32
      %216 = vector.broadcast %cst_68 : f32 to vector<2x128xf32>
      %217 = arith.addf %216, %215 : vector<2x128xf32>
      %218 = arith.divf %216, %217 : vector<2x128xf32>
      %219 = vector.extract_strided_slice %206 {offsets = [0, 256], sizes = [2, 128], strides = [1, 1]} : vector<2x512xf32> to vector<2x128xf32>
      %220 = math.tanh %219 : vector<2x128xf32>
      %221 = vector.extract_strided_slice %206 {offsets = [0, 384], sizes = [2, 128], strides = [1, 1]} : vector<2x512xf32> to vector<2x128xf32>
      %222 = arith.negf %221 : vector<2x128xf32>
      %223 = math.exp %222 : vector<2x128xf32>
      %cst_69 = arith.constant 1.000000e+00 : f32
      %224 = vector.broadcast %cst_69 : f32 to vector<2x128xf32>
      %225 = arith.addf %224, %223 : vector<2x128xf32>
      %226 = arith.divf %224, %225 : vector<2x128xf32>
      %227 = arith.mulf %218, %194 : vector<2x128xf32>
      %228 = arith.mulf %212, %220 : vector<2x128xf32>
      %229 = arith.addf %227, %228 : vector<2x128xf32>
      %230 = math.tanh %229 : vector<2x128xf32>
      %231 = arith.mulf %226, %230 : vector<2x128xf32>
      %232 = vector.broadcast %196 : i32 to vector<2x1xi32>
      %233 = arith.cmpi slt, %232, %11 : vector<2x1xi32>
      %234 = vector.shape_cast %233 : vector<2x1xi1> to vector<2x1xi1>
      %235 = vector.broadcast %234 : vector<2x1xi1> to vector<2x128xi1>
      %236 = arith.select %235, %231, %191 : vector<2x128xi1>, vector<2x128xf32>
      %237 = vector.shape_cast %233 : vector<2x1xi1> to vector<2x1xi1>
      %238 = vector.broadcast %237 : vector<2x1xi1> to vector<2x128xi1>
      %239 = arith.select %238, %229, %194 : vector<2x128xi1>, vector<2x128xf32>
      %c5_i32 = arith.constant 5 : i32
      %c8_i32_70 = arith.constant 8 : i32
      %240 = arith.muli %arg1, %c8_i32_70 : i32
      %241 = arith.addi %240, %c5_i32 : i32
      %242 = arith.index_cast %c5_i32 : i32 to index
      %c0_71 = arith.constant 0 : index
      %c0_72 = arith.constant 0 : index
      %243 = vector.load %arg3[%242, %c0_71, %c0_72] : memref<8x2x4xf32, #tpu.memory_space<vmem>>, vector<1x2x4xf32>
      %244 = vector.shape_cast %243 : vector<1x2x4xf32> to vector<2x4xf32>
      %c0_73 = arith.constant 0 : index
      %c0_74 = arith.constant 0 : index
      %245 = vector.load %arg5[%c0_73, %c0_74] : memref<4x512xf32, #tpu.memory_space<vmem>>, vector<4x512xf32>
      %cst_75 = arith.constant dense<0.000000e+00> : vector<2x512xf32>
      %246 = tpu.matmul %244, %245, %cst_75 {dimension_numbers = #tpu.dot_dimension_numbers<[1], [0], [0], [1], [0, 0, 1, 1], [], []>} : vector<2x4xf32>, vector<4x512xf32>, vector<2x512xf32> -> vector<2x512xf32>
      %c0_76 = arith.constant 0 : index
      %c0_77 = arith.constant 0 : index
      %247 = vector.load %arg6[%c0_76, %c0_77] : memref<128x512xf32, #tpu.memory_space<vmem>>, vector<128x512xf32>
      %cst_78 = arith.constant dense<0.000000e+00> : vector<2x512xf32>
      %248 = tpu.matmul %236, %247, %cst_78 {dimension_numbers = #tpu.dot_dimension_numbers<[1], [0], [0], [1], [0, 0, 1, 1], [], []>} : vector<2x128xf32>, vector<128x512xf32>, vector<2x512xf32> -> vector<2x512xf32>
      %249 = arith.addf %246, %248 : vector<2x512xf32>
      %250 = vector.broadcast %12 : vector<1x512xf32> to vector<2x512xf32>
      %251 = arith.addf %249, %250 : vector<2x512xf32>
      %252 = vector.extract_strided_slice %251 {offsets = [0, 0], sizes = [2, 128], strides = [1, 1]} : vector<2x512xf32> to vector<2x128xf32>
      %253 = arith.negf %252 : vector<2x128xf32>
      %254 = math.exp %253 : vector<2x128xf32>
      %cst_79 = arith.constant 1.000000e+00 : f32
      %255 = vector.broadcast %cst_79 : f32 to vector<2x128xf32>
      %256 = arith.addf %255, %254 : vector<2x128xf32>
      %257 = arith.divf %255, %256 : vector<2x128xf32>
      %258 = vector.extract_strided_slice %251 {offsets = [0, 128], sizes = [2, 128], strides = [1, 1]} : vector<2x512xf32> to vector<2x128xf32>
      %259 = arith.negf %258 : vector<2x128xf32>
      %260 = math.exp %259 : vector<2x128xf32>
      %cst_80 = arith.constant 1.000000e+00 : f32
      %261 = vector.broadcast %cst_80 : f32 to vector<2x128xf32>
      %262 = arith.addf %261, %260 : vector<2x128xf32>
      %263 = arith.divf %261, %262 : vector<2x128xf32>
      %264 = vector.extract_strided_slice %251 {offsets = [0, 256], sizes = [2, 128], strides = [1, 1]} : vector<2x512xf32> to vector<2x128xf32>
      %265 = math.tanh %264 : vector<2x128xf32>
      %266 = vector.extract_strided_slice %251 {offsets = [0, 384], sizes = [2, 128], strides = [1, 1]} : vector<2x512xf32> to vector<2x128xf32>
      %267 = arith.negf %266 : vector<2x128xf32>
      %268 = math.exp %267 : vector<2x128xf32>
      %cst_81 = arith.constant 1.000000e+00 : f32
      %269 = vector.broadcast %cst_81 : f32 to vector<2x128xf32>
      %270 = arith.addf %269, %268 : vector<2x128xf32>
      %271 = arith.divf %269, %270 : vector<2x128xf32>
      %272 = arith.mulf %263, %239 : vector<2x128xf32>
      %273 = arith.mulf %257, %265 : vector<2x128xf32>
      %274 = arith.addf %272, %273 : vector<2x128xf32>
      %275 = math.tanh %274 : vector<2x128xf32>
      %276 = arith.mulf %271, %275 : vector<2x128xf32>
      %277 = vector.broadcast %241 : i32 to vector<2x1xi32>
      %278 = arith.cmpi slt, %277, %11 : vector<2x1xi32>
      %279 = vector.shape_cast %278 : vector<2x1xi1> to vector<2x1xi1>
      %280 = vector.broadcast %279 : vector<2x1xi1> to vector<2x128xi1>
      %281 = arith.select %280, %276, %236 : vector<2x128xi1>, vector<2x128xf32>
      %282 = vector.shape_cast %278 : vector<2x1xi1> to vector<2x1xi1>
      %283 = vector.broadcast %282 : vector<2x1xi1> to vector<2x128xi1>
      %284 = arith.select %283, %274, %239 : vector<2x128xi1>, vector<2x128xf32>
      %c6_i32 = arith.constant 6 : i32
      %c8_i32_82 = arith.constant 8 : i32
      %285 = arith.muli %arg1, %c8_i32_82 : i32
      %286 = arith.addi %285, %c6_i32 : i32
      %287 = arith.index_cast %c6_i32 : i32 to index
      %c0_83 = arith.constant 0 : index
      %c0_84 = arith.constant 0 : index
      %288 = vector.load %arg3[%287, %c0_83, %c0_84] : memref<8x2x4xf32, #tpu.memory_space<vmem>>, vector<1x2x4xf32>
      %289 = vector.shape_cast %288 : vector<1x2x4xf32> to vector<2x4xf32>
      %c0_85 = arith.constant 0 : index
      %c0_86 = arith.constant 0 : index
      %290 = vector.load %arg5[%c0_85, %c0_86] : memref<4x512xf32, #tpu.memory_space<vmem>>, vector<4x512xf32>
      %cst_87 = arith.constant dense<0.000000e+00> : vector<2x512xf32>
      %291 = tpu.matmul %289, %290, %cst_87 {dimension_numbers = #tpu.dot_dimension_numbers<[1], [0], [0], [1], [0, 0, 1, 1], [], []>} : vector<2x4xf32>, vector<4x512xf32>, vector<2x512xf32> -> vector<2x512xf32>
      %c0_88 = arith.constant 0 : index
      %c0_89 = arith.constant 0 : index
      %292 = vector.load %arg6[%c0_88, %c0_89] : memref<128x512xf32, #tpu.memory_space<vmem>>, vector<128x512xf32>
      %cst_90 = arith.constant dense<0.000000e+00> : vector<2x512xf32>
      %293 = tpu.matmul %281, %292, %cst_90 {dimension_numbers = #tpu.dot_dimension_numbers<[1], [0], [0], [1], [0, 0, 1, 1], [], []>} : vector<2x128xf32>, vector<128x512xf32>, vector<2x512xf32> -> vector<2x512xf32>
      %294 = arith.addf %291, %293 : vector<2x512xf32>
      %295 = vector.broadcast %12 : vector<1x512xf32> to vector<2x512xf32>
      %296 = arith.addf %294, %295 : vector<2x512xf32>
      %297 = vector.extract_strided_slice %296 {offsets = [0, 0], sizes = [2, 128], strides = [1, 1]} : vector<2x512xf32> to vector<2x128xf32>
      %298 = arith.negf %297 : vector<2x128xf32>
      %299 = math.exp %298 : vector<2x128xf32>
      %cst_91 = arith.constant 1.000000e+00 : f32
      %300 = vector.broadcast %cst_91 : f32 to vector<2x128xf32>
      %301 = arith.addf %300, %299 : vector<2x128xf32>
      %302 = arith.divf %300, %301 : vector<2x128xf32>
      %303 = vector.extract_strided_slice %296 {offsets = [0, 128], sizes = [2, 128], strides = [1, 1]} : vector<2x512xf32> to vector<2x128xf32>
      %304 = arith.negf %303 : vector<2x128xf32>
      %305 = math.exp %304 : vector<2x128xf32>
      %cst_92 = arith.constant 1.000000e+00 : f32
      %306 = vector.broadcast %cst_92 : f32 to vector<2x128xf32>
      %307 = arith.addf %306, %305 : vector<2x128xf32>
      %308 = arith.divf %306, %307 : vector<2x128xf32>
      %309 = vector.extract_strided_slice %296 {offsets = [0, 256], sizes = [2, 128], strides = [1, 1]} : vector<2x512xf32> to vector<2x128xf32>
      %310 = math.tanh %309 : vector<2x128xf32>
      %311 = vector.extract_strided_slice %296 {offsets = [0, 384], sizes = [2, 128], strides = [1, 1]} : vector<2x512xf32> to vector<2x128xf32>
      %312 = arith.negf %311 : vector<2x128xf32>
      %313 = math.exp %312 : vector<2x128xf32>
      %cst_93 = arith.constant 1.000000e+00 : f32
      %314 = vector.broadcast %cst_93 : f32 to vector<2x128xf32>
      %315 = arith.addf %314, %313 : vector<2x128xf32>
      %316 = arith.divf %314, %315 : vector<2x128xf32>
      %317 = arith.mulf %308, %284 : vector<2x128xf32>
      %318 = arith.mulf %302, %310 : vector<2x128xf32>
      %319 = arith.addf %317, %318 : vector<2x128xf32>
      %320 = math.tanh %319 : vector<2x128xf32>
      %321 = arith.mulf %316, %320 : vector<2x128xf32>
      %322 = vector.broadcast %286 : i32 to vector<2x1xi32>
      %323 = arith.cmpi slt, %322, %11 : vector<2x1xi32>
      %324 = vector.shape_cast %323 : vector<2x1xi1> to vector<2x1xi1>
      %325 = vector.broadcast %324 : vector<2x1xi1> to vector<2x128xi1>
      %326 = arith.select %325, %321, %281 : vector<2x128xi1>, vector<2x128xf32>
      %327 = vector.shape_cast %323 : vector<2x1xi1> to vector<2x1xi1>
      %328 = vector.broadcast %327 : vector<2x1xi1> to vector<2x128xi1>
      %329 = arith.select %328, %319, %284 : vector<2x128xi1>, vector<2x128xf32>
      %c7_i32 = arith.constant 7 : i32
      %c8_i32_94 = arith.constant 8 : i32
      %330 = arith.muli %arg1, %c8_i32_94 : i32
      %331 = arith.addi %330, %c7_i32 : i32
      %332 = arith.index_cast %c7_i32 : i32 to index
      %c0_95 = arith.constant 0 : index
      %c0_96 = arith.constant 0 : index
      %333 = vector.load %arg3[%332, %c0_95, %c0_96] : memref<8x2x4xf32, #tpu.memory_space<vmem>>, vector<1x2x4xf32>
      %334 = vector.shape_cast %333 : vector<1x2x4xf32> to vector<2x4xf32>
      %c0_97 = arith.constant 0 : index
      %c0_98 = arith.constant 0 : index
      %335 = vector.load %arg5[%c0_97, %c0_98] : memref<4x512xf32, #tpu.memory_space<vmem>>, vector<4x512xf32>
      %cst_99 = arith.constant dense<0.000000e+00> : vector<2x512xf32>
      %336 = tpu.matmul %334, %335, %cst_99 {dimension_numbers = #tpu.dot_dimension_numbers<[1], [0], [0], [1], [0, 0, 1, 1], [], []>} : vector<2x4xf32>, vector<4x512xf32>, vector<2x512xf32> -> vector<2x512xf32>
      %c0_100 = arith.constant 0 : index
      %c0_101 = arith.constant 0 : index
      %337 = vector.load %arg6[%c0_100, %c0_101] : memref<128x512xf32, #tpu.memory_space<vmem>>, vector<128x512xf32>
      %cst_102 = arith.constant dense<0.000000e+00> : vector<2x512xf32>
      %338 = tpu.matmul %326, %337, %cst_102 {dimension_numbers = #tpu.dot_dimension_numbers<[1], [0], [0], [1], [0, 0, 1, 1], [], []>} : vector<2x128xf32>, vector<128x512xf32>, vector<2x512xf32> -> vector<2x512xf32>
      %339 = arith.addf %336, %338 : vector<2x512xf32>
      %340 = vector.broadcast %12 : vector<1x512xf32> to vector<2x512xf32>
      %341 = arith.addf %339, %340 : vector<2x512xf32>
      %342 = vector.extract_strided_slice %341 {offsets = [0, 0], sizes = [2, 128], strides = [1, 1]} : vector<2x512xf32> to vector<2x128xf32>
      %343 = arith.negf %342 : vector<2x128xf32>
      %344 = math.exp %343 : vector<2x128xf32>
      %cst_103 = arith.constant 1.000000e+00 : f32
      %345 = vector.broadcast %cst_103 : f32 to vector<2x128xf32>
      %346 = arith.addf %345, %344 : vector<2x128xf32>
      %347 = arith.divf %345, %346 : vector<2x128xf32>
      %348 = vector.extract_strided_slice %341 {offsets = [0, 128], sizes = [2, 128], strides = [1, 1]} : vector<2x512xf32> to vector<2x128xf32>
      %349 = arith.negf %348 : vector<2x128xf32>
      %350 = math.exp %349 : vector<2x128xf32>
      %cst_104 = arith.constant 1.000000e+00 : f32
      %351 = vector.broadcast %cst_104 : f32 to vector<2x128xf32>
      %352 = arith.addf %351, %350 : vector<2x128xf32>
      %353 = arith.divf %351, %352 : vector<2x128xf32>
      %354 = vector.extract_strided_slice %341 {offsets = [0, 256], sizes = [2, 128], strides = [1, 1]} : vector<2x512xf32> to vector<2x128xf32>
      %355 = math.tanh %354 : vector<2x128xf32>
      %356 = vector.extract_strided_slice %341 {offsets = [0, 384], sizes = [2, 128], strides = [1, 1]} : vector<2x512xf32> to vector<2x128xf32>
      %357 = arith.negf %356 : vector<2x128xf32>
      %358 = math.exp %357 : vector<2x128xf32>
      %cst_105 = arith.constant 1.000000e+00 : f32
      %359 = vector.broadcast %cst_105 : f32 to vector<2x128xf32>
      %360 = arith.addf %359, %358 : vector<2x128xf32>
      %361 = arith.divf %359, %360 : vector<2x128xf32>
      %362 = arith.mulf %353, %329 : vector<2x128xf32>
      %363 = arith.mulf %347, %355 : vector<2x128xf32>
      %364 = arith.addf %362, %363 : vector<2x128xf32>
      %365 = math.tanh %364 : vector<2x128xf32>
      %366 = arith.mulf %361, %365 : vector<2x128xf32>
      %367 = vector.broadcast %331 : i32 to vector<2x1xi32>
      %368 = arith.cmpi slt, %367, %11 : vector<2x1xi32>
      %369 = vector.shape_cast %368 : vector<2x1xi1> to vector<2x1xi1>
      %370 = vector.broadcast %369 : vector<2x1xi1> to vector<2x128xi1>
      %371 = arith.select %370, %366, %326 : vector<2x128xi1>, vector<2x128xf32>
      %372 = vector.shape_cast %368 : vector<2x1xi1> to vector<2x1xi1>
      %373 = vector.broadcast %372 : vector<2x1xi1> to vector<2x128xi1>
      %374 = arith.select %373, %364, %329 : vector<2x128xi1>, vector<2x128xf32>
      %c8_i32_106 = arith.constant 8 : i32
      %c0_107 = arith.constant 0 : index
      %c0_108 = arith.constant 0 : index
      %375 = vector.load %arg9[%c0_107, %c0_108] : memref<2x128xf32, #tpu.memory_space<vmem>>, vector<2x128xf32>
      tpu.vector_store %arg9[%c0_107, %c0_108], %371 {strides = array<i32>} : memref<2x128xf32, #tpu.memory_space<vmem>>, vector<2x128xf32>,
      %c0_109 = arith.constant 0 : index
      %c0_110 = arith.constant 0 : index
      %376 = vector.load %arg10[%c0_109, %c0_110] : memref<2x128xf32, #tpu.memory_space<vmem>>, vector<2x128xf32>
      tpu.vector_store %arg10[%c0_109, %c0_110], %374 {strides = array<i32>} : memref<2x128xf32, #tpu.memory_space<vmem>>, vector<2x128xf32>,
    } else {
    }
    %c0_i32_2 = arith.constant 0 : i32
    %8 = arith.cmpi eq, %arg1, %c0_i32_2 : i32
    %9 = arith.extui %8 : i1 to i32
    %c0_i32_3 = arith.constant 0 : i32
    %10 = arith.cmpi ne, %9, %c0_i32_3 : i32
    scf.if %10 {
      %c0 = arith.constant 0 : index
      %c0_4 = arith.constant 0 : index
      %11 = vector.load %arg9[%c0, %c0_4] : memref<2x128xf32, #tpu.memory_space<vmem>>, vector<2x128xf32>
      %c0_5 = arith.constant 0 : index
      %c0_6 = arith.constant 0 : index
      %12 = vector.load %arg8[%c0_5, %c0_6] : memref<2x128xf32, #tpu.memory_space<vmem>>, vector<2x128xf32>
      tpu.vector_store %arg8[%c0_5, %c0_6], %11 {strides = array<i32>} : memref<2x128xf32, #tpu.memory_space<vmem>>, vector<2x128xf32>,
    } else {
    }
    return
  }
  func.func @transform_0(%arg0: i32, %arg1: i32, %arg2: memref<1xi32, #tpu.memory_space<smem>>) -> (i32, i32, i32) {
    %0 = arith.index_cast %arg0 : i32 to index
    %1 = memref.load %arg2[%0] : memref<1xi32, #tpu.memory_space<smem>>
    %c1_i32 = arith.constant 1 : i32
    %2 = arith.subi %1, %c1_i32 : i32
    %3 = arith.minsi %arg1, %2 : i32
    %c0_i32 = arith.constant 0 : i32
    %c0_i32_0 = arith.constant 0 : i32
    return %3, %arg0, %c0_i32 : i32, i32, i32
  }
  func.func @transform_1(%arg0: i32, %arg1: i32, %arg2: memref<1xi32, #tpu.memory_space<smem>>) -> (i32, i32) {
    %c0_i32 = arith.constant 0 : i32
    %c0_i32_0 = arith.constant 0 : i32
    return %arg0, %c0_i32 : i32, i32
  }
  func.func @transform_2(%arg0: i32, %arg1: i32, %arg2: memref<1xi32, #tpu.memory_space<smem>>) -> (i32, i32) {
    %c0_i32 = arith.constant 0 : i32
    %c0_i32_0 = arith.constant 0 : i32
    %c0_i32_1 = arith.constant 0 : i32
    return %c0_i32, %c0_i32_0 : i32, i32
  }
  func.func @transform_3(%arg0: i32, %arg1: i32, %arg2: memref<1xi32, #tpu.memory_space<smem>>) -> (i32, i32) {
    %c0_i32 = arith.constant 0 : i32
    %c0_i32_0 = arith.constant 0 : i32
    %c0_i32_1 = arith.constant 0 : i32
    return %c0_i32, %c0_i32_0 : i32, i32
  }
  func.func @transform_4(%arg0: i32, %arg1: i32, %arg2: memref<1xi32, #tpu.memory_space<smem>>) -> (i32, i32) {
    %c0_i32 = arith.constant 0 : i32
    %c0_i32_0 = arith.constant 0 : i32
    %c0_i32_1 = arith.constant 0 : i32
    return %c0_i32, %c0_i32_0 : i32, i32
  }
  func.func @transform_5(%arg0: i32, %arg1: i32, %arg2: memref<1xi32, #tpu.memory_space<smem>>) -> (i32, i32) {
    %c0_i32 = arith.constant 0 : i32
    %c0_i32_0 = arith.constant 0 : i32
    return %arg0, %c0_i32 : i32, i32
  }
}

</mosaic_0001>

<llo_original>
// kernel: tpu_custom_call.1
$region0: #{tpu_custom_call.1}
  #allocation0 [shape = 'u32[]', space=smem, size = 0x4, offset = 0x4, fixed_abs, tag = 'smem constant byte address 0x4 - core index']
  #allocation1 [shape = 'u32[72,128]{1,0:T(1,128)}', space=vmem, size = 0x9000, scoped, tag = 'internal scratch']
  #allocation2 [shape = 'f32[2,128]{1,0:T(2,128)}', space=vmem, size = 0x400, scoped, tag = 'scratch operand']
  #allocation3 [shape = 'f32[2,128]{1,0:T(2,128)}', space=vmem, size = 0x400, scoped, tag = 'scratch operand']
  #allocation4 [shape = 's32[1]{0}', space=sflag, size = 0x4, scoped, tag = 'scoped memory for tpu_custom_call.1']
  #allocation5 [shape = 's32[1]{0:T(128)S(6)}', space=smem, size = 0x200, scoped, tag = 'prefetched SMEM operand 0']
  %s0 = inlined_call_operand.<no memory space> [shape: s32[1], index: 0, kind: input, shape index: {}]
  %s1 = inlined_call_operand.vmem [shape: f32[8,2,4], index: 1, kind: input, shape index: {}]
  %s2 = inlined_call_operand.vmem [shape: s32[2,1], index: 2, kind: input, shape index: {}]
  %s3 = inlined_call_operand.vmem [shape: f32[4,512], index: 3, kind: input, shape index: {}]
  %s4 = inlined_call_operand.hbm [shape: f32[128,512], index: 4, kind: input, shape index: {}]
  %s5 = inlined_call_operand.vmem [shape: f32[1,512], index: 5, kind: input, shape index: {}]
  %s6 = inlined_call_operand.hbm [shape: f32[2,128], index: 6, kind: output, shape index: {}]
  %s7 = sld [smem:[#allocation0]]
  $region46: #{tpu_custom_call.1} parent=0
    _
  %s9 = ssub.s32 1, %s7
  %s10 = scalar_select 0, %s9, %s7
  %11 = sst [smem:[#allocation5]] %s0
  $region1: #{tpu_custom_call.1} parent=0
    #allocation6 [shape = 'u8[262144]{0}', space=vmem, size = 0x40000, scoped, tag = 'input window, operand 4, single buffered']
    #allocation7 [shape = 's32[1]{0}', space=sflag, size = 0x4, scoped, tag = 'scoped memory for tpu_custom_call.1']
    #allocation8 [shape = 's32[1]{0}', space=sflag, size = 0x4, scoped, tag = 'scoped memory for tpu_custom_call.1']
    #allocation9 [shape = 'u8[1024]{0}', space=vmem, size = 0x400, scoped, tag = 'output window, operand 0, single buffered']
    %12 = vsyncpa [#allocation7], 0
    %13 = vsyncpa [#allocation8], 0
    // Predicated region
    $region2: #{tpu_custom_call.1} parent=1 // pred_check
      _
    $region3: #{tpu_custom_call.1} parent=1 // pred_check_branch
      %15 = sbr.rel (0) target = $region5
    $region4: #{tpu_custom_call.1} parent=1 // pred_region
      %s16 = sld [smem:[#allocation5]]
      %s17 = ssub.s32 %s16, 1
      %p18 = scmp.lt.s32.totalorder 0, %s17
      %s19 = scalar_select %p18, 0, %s17
      %s20 = smul.u32 8, %s19
      %p21 = scmp.lt.s32.totalorder %s20, 7
      %s22 = scalar_select %p21, %s20, 7
      %s23 = smul.addr %s22, 2
      %s24 = scalar_lea.vmem %s1, %s23
      %s25 = sld [smem:[#allocation5]]
      %s26 = ssub.s32 %s25, 1
      %p27 = scmp.lt.s32.totalorder 0, %s26
      %s28 = scalar_select %p27, 0, %s26
      %s29 = smul.u32 8, %s28
    $region5: #{tpu_custom_call.1} parent=1 // pred_fallthru
      _
    // Predicated region
    $region6: #{tpu_custom_call.1} parent=1 // pred_check
      _
    $region7: #{tpu_custom_call.1} parent=1 // pred_check_branch
      %31 = sbr.rel (0) target = $region9
    $region8: #{tpu_custom_call.1} parent=1 // pred_region
      _
    $region9: #{tpu_custom_call.1} parent=1 // pred_fallthru
      _
    // Predicated region
    $region10: #{tpu_custom_call.1} parent=1 // pred_check
      _
    $region11: #{tpu_custom_call.1} parent=1 // pred_check_branch
      %33 = sbr.rel (0) target = $region13
    $region12: #{tpu_custom_call.1} parent=1 // pred_region
      _
    $region13: #{tpu_custom_call.1} parent=1 // pred_fallthru
      _
    // Predicated region
    $region14: #{tpu_custom_call.1} parent=1 // pred_check
      _
    $region15: #{tpu_custom_call.1} parent=1 // pred_check_branch
      %35 = sbr.rel (0) target = $region17
    $region16: #{tpu_custom_call.1} parent=1 // pred_region
      %37 = vsyncadd [#allocation7], 0
      %s38 = sshll.u32 %s4, 4
      %s39 = int_to_ptr.hbm [resolvable:$true] %s38
      %s40 = sshll.u32 [#allocation6], 4
      %s41 = int_to_ptr.vmem [resolvable:$true] %s40
      %46 = dma.hbm_to_vmem [thread:$0]  %s39, 8192, %s41, [#allocation7], 512, 512, 32
    $region17: #{tpu_custom_call.1} parent=1 // pred_fallthru
      _
    // Predicated region
    $region18: #{tpu_custom_call.1} parent=1 // pred_check
      _
    $region19: #{tpu_custom_call.1} parent=1 // pred_check_branch
      %48 = sbr.rel (0) target = $region21
    $region20: #{tpu_custom_call.1} parent=1 // pred_region
      _
    $region21: #{tpu_custom_call.1} parent=1 // pred_fallthru
      _
    // Predicated region
    $region22: #{tpu_custom_call.1} parent=1 // pred_check
      _
    $region23: #{tpu_custom_call.1} parent=1 // pred_check_branch
      %50 = sbr.rel (0) target = $region25
    $region24: #{tpu_custom_call.1} parent=1 // pred_region
      %52 = dma.done [#allocation7], 8192
    $region25: #{tpu_custom_call.1} parent=1 // pred_fallthru
      _
    %s53 = sld [smem:[#allocation5]]
    %s54 = ssub.s32 %s53, 1
    %p55 = scmp.lt.s32.totalorder 0, %s54
    %s56 = scalar_select %p55, 0, %s54
    %s57 = smul.u32 8, %s56
    %p58 = scmp.lt.s32.totalorder %s57, 7
    %s59 = scalar_select %p58, %s57, 7
    %s60 = smul.addr %s59, 2
    %s61 = scalar_lea.vmem %s1, %s60
    %s62 = sld [smem:[#allocation5]]
    %s63 = ssub.s32 %s62, 1
    %p64 = scmp.lt.s32.totalorder 0, %s63
    %s65 = scalar_select %p64, 0, %s63
    %s66 = smul.u32 8, %s65
    %p67 = scmp.lt.s32.totalorder %s66, 7
    %s68 = scalar_select %p67, %s66, 7
    %s69 = smul.addr %s68, 2
    %s70 = scalar_lea.vmem %s1, %s69
    %s71 = sld [smem:[#allocation5]]
    %s72 = ssub.s32 %s71, 1
    %p73 = scmp.lt.s32.totalorder 0, %s72
    %s74 = scalar_select %p73, 0, %s72
    %s75 = smul.u32 8, %s74
    %p76 = scmp.eq.s32.totalorder 0, 0
    // Predicated region
    $region26: #{tpu_custom_call.1} parent=1 // pred_check
      %p77 = pneg %p76
    $region27: #{tpu_custom_call.1} parent=1 // pred_check_branch
      %79 = sbr.rel (%p77) target = $region29
    $region28: #{tpu_custom_call.1} parent=1 // pred_region
      %80 = vst [vmem:[#allocation2] sm:$0x3] 0.0
      %81 = vst [vmem:[#allocation3] sm:$0x3] 0.0
    $region29: #{tpu_custom_call.1} parent=1 // pred_fallthru
      _
    %s82 = sld [smem:[#allocation5]]
    %p83 = scmp.lt.s32.totalorder 0, %s82
    // Predicated region
    $region30: #{tpu_custom_call.1} parent=1 // pred_check
      %p84 = pneg %p83
    $region31: #{tpu_custom_call.1} parent=1 // pred_check_branch
      %86 = sbr.rel (%p84) target = $region33
    $region32: #{tpu_custom_call.1} parent=1 // pred_region
      %v87 = vld [vmem:[%s2] sm:$0x3]
      %v88 = vld [vmem:[%s5] sm:$0xf]
      %v89 = vld [vmem:[#allocation2] sm:$0x3]
      %v90 = vld [vmem:[#allocation3] sm:$0x3]
      %s91 = smul.u32 0, 8
      %v92 = vld [vmem:[%s70] sm:$0x3]
      %v93 = vld [vmem:[%s3] sm:$0xff]
      %v94 = vld [vmem:[%s3 + $0x8] sm:$0xff]
      %v95 = vld [vmem:[#allocation6] sm:$0xff]
      %v96 = vld [vmem:[#allocation6 + $0x8] sm:$0xff]
      %v97 = vld [vmem:[#allocation6 + $0x10] sm:$0xff]
      %v98 = vld [vmem:[#allocation6 + $0x18] sm:$0xff]
      %v99 = vld [vmem:[#allocation6 + $0x20] sm:$0xff]
      %v100 = vld [vmem:[#allocation6 + $0x28] sm:$0xff]
      %v101 = vld [vmem:[#allocation6 + $0x30] sm:$0xff]
      %v102 = vld [vmem:[#allocation6 + $0x38] sm:$0xff]
      %v103 = vld [vmem:[#allocation6 + $0x40] sm:$0xff]
      %v104 = vld [vmem:[#allocation6 + $0x48] sm:$0xff]
      %v105 = vld [vmem:[#allocation6 + $0x50] sm:$0xff]
      %v106 = vld [vmem:[#allocation6 + $0x58] sm:$0xff]
      %v107 = vld [vmem:[#allocation6 + $0x60] sm:$0xff]
      %v108 = vld [vmem:[#allocation6 + $0x68] sm:$0xff]
      %v109 = vld [vmem:[#allocation6 + $0x70] sm:$0xff]
      %v110 = vld [vmem:[#allocation6 + $0x78] sm:$0xff]
      %v111 = vld [vmem:[#allocation6 + $0x80] sm:$0xff]
      %v112 = vld [vmem:[#allocation6 + $0x88] sm:$0xff]
      %v113 = vld [vmem:[#allocation6 + $0x90] sm:$0xff]
      %v114 = vld [vmem:[#allocation6 + $0x98] sm:$0xff]
      %v115 = vld [vmem:[#allocation6 + $0xa0] sm:$0xff]
      %v116 = vld [vmem:[#allocation6 + $0xa8] sm:$0xff]
      %v117 = vld [vmem:[#allocation6 + $0xb0] sm:$0xff]
      %v118 = vld [vmem:[#allocation6 + $0xb8] sm:$0xff]
      %v119 = vld [vmem:[#allocation6 + $0xc0] sm:$0xff]
      %v120 = vld [vmem:[#allocation6 + $0xc8] sm:$0xff]
      %v121 = vld [vmem:[#allocation6 + $0xd0] sm:$0xff]
      %v122 = vld [vmem:[#allocation6 + $0xd8] sm:$0xff]
      %v123 = vld [vmem:[#allocation6 + $0xe0] sm:$0xff]
      %v124 = vld [vmem:[#allocation6 + $0xe8] sm:$0xff]
      %v125 = vld [vmem:[#allocation6 + $0xf0] sm:$0xff]
      %v126 = vld [vmem:[#allocation6 + $0xf8] sm:$0xff]
      %v127 = vld [vmem:[#allocation6 + $0x100] sm:$0xff]
      %v128 = vld [vmem:[#allocation6 + $0x108] sm:$0xff]
      %v129 = vld [vmem:[#allocation6 + $0x110] sm:$0xff]
      %v130 = vld [vmem:[#allocation6 + $0x118] sm:$0xff]
      %v131 = vld [vmem:[#allocation6 + $0x120] sm:$0xff]
      %v132 = vld [vmem:[#allocation6 + $0x128] sm:$0xff]
      %v133 = vld [vmem:[#allocation6 + $0x130] sm:$0xff]
      %v134 = vld [vmem:[#allocation6 + $0x138] sm:$0xff]
      %v135 = vld [vmem:[#allocation6 + $0x140] sm:$0xff]
      %v136 = vld [vmem:[#allocation6 + $0x148] sm:$0xff]
      %v137 = vld [vmem:[#allocation6 + $0x150] sm:$0xff]
      %v138 = vld [vmem:[#allocation6 + $0x158] sm:$0xff]
      %v139 = vld [vmem:[#allocation6 + $0x160] sm:$0xff]
      %v140 = vld [vmem:[#allocation6 + $0x168] sm:$0xff]
      %v141 = vld [vmem:[#allocation6 + $0x170] sm:$0xff]
      %v142 = vld [vmem:[#allocation6 + $0x178] sm:$0xff]
      %v143 = vld [vmem:[#allocation6 + $0x180] sm:$0xff]
      %v144 = vld [vmem:[#allocation6 + $0x188] sm:$0xff]
      %v145 = vld [vmem:[#allocation6 + $0x190] sm:$0xff]
      %v146 = vld [vmem:[#allocation6 + $0x198] sm:$0xff]
      %v147 = vld [vmem:[#allocation6 + $0x1a0] sm:$0xff]
      %v148 = vld [vmem:[#allocation6 + $0x1a8] sm:$0xff]
      %v149 = vld [vmem:[#allocation6 + $0x1b0] sm:$0xff]
      %v150 = vld [vmem:[#allocation6 + $0x1b8] sm:$0xff]
      %v151 = vld [vmem:[#allocation6 + $0x1c0] sm:$0xff]
      %v152 = vld [vmem:[#allocation6 + $0x1c8] sm:$0xff]
      %v153 = vld [vmem:[#allocation6 + $0x1d0] sm:$0xff]
      %v154 = vld [vmem:[#allocation6 + $0x1d8] sm:$0xff]
      %v155 = vld [vmem:[#allocation6 + $0x1e0] sm:$0xff]
      %v156 = vld [vmem:[#allocation6 + $0x1e8] sm:$0xff]
      %v157 = vld [vmem:[#allocation6 + $0x1f0] sm:$0xff]
      %v158 = vld [vmem:[#allocation6 + $0x1f8] sm:$0xff]
      %159 = vmatpush.msra.mxu0 %v155
      %160 = vmatpush.msra.mxu0 %v151
      %161 = vmatpush.msra.mxu0 %v147
      %162 = vmatpush.msra.mxu0 %v143
      %163 = vmatpush.msra.mxu0 %v139
      %164 = vmatpush.msra.mxu0 %v135
      %165 = vmatpush.msra.mxu0 %v131
      %166 = vmatpush.msra.mxu0 %v127
      %167 = vmatpush.msra.mxu0 %v123
      %168 = vmatpush.msra.mxu0 %v119
      %169 = vmatpush.msra.mxu0 %v115
      %170 = vmatpush.msra.mxu0 %v111
      %171 = vmatpush.msra.mxu0 %v107
      %172 = vmatpush.msra.mxu0 %v103
      %173 = vmatpush.msra.mxu0 %v99
      %174 = vmatpush.msra.mxu0 %v95
      %175 = vmatmul.f32.gmra.mxu0 %v89
      %v176 = vpop.f32.mrf.mxu0
      %v177 = vadd.f32 0.0, %v176
      %178 = vdwg.mxu0
      %179 = vmatpush.msra.mxu0 %v156
      %180 = vmatpush.msra.mxu0 %v152
      %181 = vmatpush.msra.mxu0 %v148
      %182 = vmatpush.msra.mxu0 %v144
      %183 = vmatpush.msra.mxu0 %v140
      %184 = vmatpush.msra.mxu0 %v136
      %185 = vmatpush.msra.mxu0 %v132
      %186 = vmatpush.msra.mxu0 %v128
      %187 = vmatpush.msra.mxu0 %v124
      %188 = vmatpush.msra.mxu0 %v120
      %189 = vmatpush.msra.mxu0 %v116
      %190 = vmatpush.msra.mxu0 %v112
      %191 = vmatpush.msra.mxu0 %v108
      %192 = vmatpush.msra.mxu0 %v104
      %193 = vmatpush.msra.mxu0 %v100
      %194 = vmatpush.msra.mxu0 %v96
      %195 = vmatmul.f32.gmra.mxu0 %v89
      %v196 = vpop.f32.mrf.mxu0
      %v197 = vadd.f32 0.0, %v196
      %198 = vdwg.mxu0
      %199 = vmatpush.msra.mxu0 %v157
      %200 = vmatpush.msra.mxu0 %v153
      %201 = vmatpush.msra.mxu0 %v149
      %202 = vmatpush.msra.mxu0 %v145
      %203 = vmatpush.msra.mxu0 %v141
      %204 = vmatpush.msra.mxu0 %v137
      %205 = vmatpush.msra.mxu0 %v133
      %206 = vmatpush.msra.mxu0 %v129
      %207 = vmatpush.msra.mxu0 %v125
      %208 = vmatpush.msra.mxu0 %v121
      %209 = vmatpush.msra.mxu0 %v117
      %210 = vmatpush.msra.mxu0 %v113
      %211 = vmatpush.msra.mxu0 %v109
      %212 = vmatpush.msra.mxu0 %v105
      %213 = vmatpush.msra.mxu0 %v101
      %214 = vmatpush.msra.mxu0 %v97
      %215 = vmatmul.f32.gmra.mxu0 %v89
      %v216 = vpop.f32.mrf.mxu0
      %v217 = vadd.f32 0.0, %v216
      %218 = vdwg.mxu0
      %219 = vmatpush.msra.mxu0 %v158
      %220 = vmatpush.msra.mxu0 %v154
      %221 = vmatpush.msra.mxu0 %v150
      %222 = vmatpush.msra.mxu0 %v146
      %223 = vmatpush.msra.mxu0 %v142
      %224 = vmatpush.msra.mxu0 %v138
      %225 = vmatpush.msra.mxu0 %v134
      %226 = vmatpush.msra.mxu0 %v130
      %227 = vmatpush.msra.mxu0 %v126
      %228 = vmatpush.msra.mxu0 %v122
      %229 = vmatpush.msra.mxu0 %v118
      %230 = vmatpush.msra.mxu0 %v114
      %231 = vmatpush.msra.mxu0 %v110
      %232 = vmatpush.msra.mxu0 %v106
      %233 = vmatpush.msra.mxu0 %v102
      %234 = vmatpush.msra.mxu0 %v98
      %235 = vmatmul.f32.gmra.mxu0 %v89
      %v236 = vpop.f32.mrf.mxu0
      %v237 = vadd.f32 0.0, %v236
      %238 = vdwg.mxu0
      %241 = vst [vmem:[#allocation1] ss:$2 sm:$0xff] %v93
      %s242 = scalar_lea.vmem [#allocation1], 16
      %243 = vst [vmem:[%s242] ss:$2 sm:$0xff] %v94
      %v244 = vld.sshfl [vmem:[#allocation1] sm:$0xff pattern:$0x75316420]
      %v245 = vld.sshfl [vmem:[#allocation1 + $0x8] sm:$0xff pattern:$0x75316420]
      %v246 = vld.sshfl [vmem:[#allocation1 + $0x10] sm:$0xff pattern:$0x75316420]
      %v247 = vld.sshfl [vmem:[#allocation1 + $0x18] sm:$0xff pattern:$0x75316420]
      %vm248 = vcmask 31744
      %v250 = vsel %vm248, %v92, 0
      %vm252 = vcmask 1043456
      %v253 = vsel %vm252, %v244, 0
      %v255 = vsel %vm252, %v245, 0
      %v257 = vsel %vm252, %v246, 0
      %v259 = vsel %vm252, %v247, 0
      %261 = vmatpush.msra.mxu0 0.0
      %262 = vmatpush.msra.mxu0 0.0
      %263 = vmatpush.msra.mxu0 0.0
      %264 = vmatpush.msra.mxu0 0.0
      %265 = vmatpush.msra.mxu0 0.0
      %266 = vmatpush.msra.mxu0 0.0
      %267 = vmatpush.msra.mxu0 0.0
      %268 = vmatpush.msra.mxu0 0.0
      %269 = vmatpush.msra.mxu0 0.0
      %270 = vmatpush.msra.mxu0 0.0
      %271 = vmatpush.msra.mxu0 0.0
      %272 = vmatpush.msra.mxu0 0.0
      %273 = vmatpush.msra.mxu0 0.0
      %274 = vmatpush.msra.mxu0 0.0
      %275 = vmatpush.msra.mxu0 0.0
      %276 = vmatpush.msra.mxu0 %v253
      %277 = vmatmul.f32.gmra.mxu0 %v250
      %v278 = vpop.f32.mrf.mxu0
      %v279 = vadd.f32 %v177, %v278
      %280 = vdwg.mxu0
      %281 = vmatpush.msra.mxu0 0.0
      %282 = vmatpush.msra.mxu0 0.0
      %283 = vmatpush.msra.mxu0 0.0
      %284 = vmatpush.msra.mxu0 0.0
      %285 = vmatpush.msra.mxu0 0.0
      %286 = vmatpush.msra.mxu0 0.0
      %287 = vmatpush.msra.mxu0 0.0
      %288 = vmatpush.msra.mxu0 0.0
      %289 = vmatpush.msra.mxu0 0.0
      %290 = vmatpush.msra.mxu0 0.0
      %291 = vmatpush.msra.mxu0 0.0
      %292 = vmatpush.msra.mxu0 0.0
      %293 = vmatpush.msra.mxu0 0.0
      %294 = vmatpush.msra.mxu0 0.0
      %295 = vmatpush.msra.mxu0 0.0
      %296 = vmatpush.msra.mxu0 %v255
      %297 = vmatmul.f32.gmra.mxu0 %v250
      %v298 = vpop.f32.mrf.mxu0
      %v299 = vadd.f32 %v197, %v298
      %300 = vdwg.mxu0
      %301 = vmatpush.msra.mxu0 0.0
      %302 = vmatpush.msra.mxu0 0.0
      %303 = vmatpush.msra.mxu0 0.0
      %304 = vmatpush.msra.mxu0 0.0
      %305 = vmatpush.msra.mxu0 0.0
      %306 = vmatpush.msra.mxu0 0.0
      %307 = vmatpush.msra.mxu0 0.0
      %308 = vmatpush.msra.mxu0 0.0
      %309 = vmatpush.msra.mxu0 0.0
      %310 = vmatpush.msra.mxu0 0.0
      %311 = vmatpush.msra.mxu0 0.0
      %312 = vmatpush.msra.mxu0 0.0
      %313 = vmatpush.msra.mxu0 0.0
      %314 = vmatpush.msra.mxu0 0.0
      %315 = vmatpush.msra.mxu0 0.0
      %316 = vmatpush.msra.mxu0 %v257
      %317 = vmatmul.f32.gmra.mxu0 %v250
      %v318 = vpop.f32.mrf.mxu0
      %v319 = vadd.f32 %v217, %v318
      %320 = vdwg.mxu0
      %321 = vmatpush.msra.mxu0 0.0
      %322 = vmatpush.msra.mxu0 0.0
      %323 = vmatpush.msra.mxu0 0.0
      %324 = vmatpush.msra.mxu0 0.0
      %325 = vmatpush.msra.mxu0 0.0
      %326 = vmatpush.msra.mxu0 0.0
      %327 = vmatpush.msra.mxu0 0.0
      %328 = vmatpush.msra.mxu0 0.0
      %329 = vmatpush.msra.mxu0 0.0
      %330 = vmatpush.msra.mxu0 0.0
      %331 = vmatpush.msra.mxu0 0.0
      %332 = vmatpush.msra.mxu0 0.0
      %333 = vmatpush.msra.mxu0 0.0
      %334 = vmatpush.msra.mxu0 0.0
      %335 = vmatpush.msra.mxu0 0.0
      %336 = vmatpush.msra.mxu0 %v259
      %337 = vmatmul.f32.gmra.mxu0 %v250
      %v338 = vpop.f32.mrf.mxu0
      %v339 = vadd.f32 %v237, %v338
      %340 = vdwg.mxu0
      %v342 = vperm.slane %v88, 0
      %v343 = vperm.slane %v88, 1
      %v344 = vperm.slane %v88, 2
      %v345 = vperm.slane %v88, 3
      %v350 = vadd.f32 %v279, %v342
      %v351 = vadd.f32 %v299, %v343
      %v352 = vadd.f32 %v319, %v344
      %v353 = vadd.f32 %v339, %v345
      %v354 = vxor.u32 %v350, 2147483648
      %v355 = vmul.f32 %v354, 1.442695
      %v356 = vpow.pop %v355
      %v357 = vadd.f32 %v356, 1.0
      %v358 = vrcp.pop %v357
      %v359 = vmul.f32 %v357, %v358
      %v360 = vsub.f32 1.0, %v359
      %v361 = vmul.f32 %v358, %v360
      %v362 = vadd.f32 %v358, %v361
      %vm363 = vweird.f32 %v357
      %vm364 = vweird.f32 %v358
      %vm365 = vmor %vm363, %vm364
      %v366 = vsel %vm365, %v358, %v362
      %v367 = vand.u32 2147483647, %v357
      %vm368 = vcmp.eq.f32.partialorder %v367, 8.507059e+37
      %v369 = vand.u32 %v357, 2147483648
      %v370 = vor.u32 1.1754944e-38, %v369
      %v371 = vsel %vm368, %v370, %v366
      %v372 = vmul.f32 1.0, %v371
      %v373 = vxor.u32 %v351, 2147483648
      %v374 = vmul.f32 %v373, 1.442695
      %v375 = vpow.pop %v374
      %v376 = vadd.f32 %v375, 1.0
      %v377 = vrcp.pop %v376
      %v378 = vmul.f32 %v376, %v377
      %v379 = vsub.f32 1.0, %v378
      %v380 = vmul.f32 %v377, %v379
      %v381 = vadd.f32 %v377, %v380
      %vm382 = vweird.f32 %v376
      %vm383 = vweird.f32 %v377
      %vm384 = vmor %vm382, %vm383
      %v385 = vsel %vm384, %v377, %v381
      %v386 = vand.u32 2147483647, %v376
      %vm387 = vcmp.eq.f32.partialorder %v386, 8.507059e+37
      %v388 = vand.u32 %v376, 2147483648
      %v389 = vor.u32 1.1754944e-38, %v388
      %v390 = vsel %vm387, %v389, %v385
      %v391 = vmul.f32 1.0, %v390
      %v392 = vtanh.pop %v352
      %v393 = vxor.u32 %v353, 2147483648
      %v394 = vmul.f32 %v393, 1.442695
      %v395 = vpow.pop %v394
      %v396 = vadd.f32 %v395, 1.0
      %v397 = vrcp.pop %v396
      %v398 = vmul.f32 %v396, %v397
      %v399 = vsub.f32 1.0, %v398
      %v400 = vmul.f32 %v397, %v399
      %v401 = vadd.f32 %v397, %v400
      %vm402 = vweird.f32 %v396
      %vm403 = vweird.f32 %v397
      %vm404 = vmor %vm402, %vm403
      %v405 = vsel %vm404, %v397, %v401
      %v406 = vand.u32 2147483647, %v396
      %vm407 = vcmp.eq.f32.partialorder %v406, 8.507059e+37
      %v408 = vand.u32 %v396, 2147483648
      %v409 = vor.u32 1.1754944e-38, %v408
      %v410 = vsel %vm407, %v409, %v405
      %v411 = vmul.f32 1.0, %v410
      %v412 = vmul.f32 %v391, %v90
      %v413 = vmul.f32 %v372, %v392
      %v414 = vadd.f32 %v412, %v413
      %v415 = vtanh.pop %v414
      %v416 = vmul.f32 %v411, %v415
      %v417 = vstv %s91
      %vm418 = vcmp.lt.s32.totalorder %v417, %v87
      %v419 = vsel %vm418, 1, 0
      %420 = vset.pattern.permute.xlu0 0
      %421 = vperm.xlu0 %420, %v419
      %v422 = vpop.permute.xlu0 %421
      %vm423 = vcmp.eq.s32.totalorder %v422, 1
      %v424 = vsel %vm423, %v416, %v89
      %v425 = vsel %vm423, %v414, %v90
      %s426 = sadd.s32 %s91, 1
      %s427 = scalar_lea.vmem %s70, 2
      %v428 = vld [vmem:[%s427] sm:$0x3]
      %429 = vmatpush.msra.mxu0 %v155
      %430 = vmatpush.msra.mxu0 %v151
      %431 = vmatpush.msra.mxu0 %v147
      %432 = vmatpush.msra.mxu0 %v143
      %433 = vmatpush.msra.mxu0 %v139
      %434 = vmatpush.msra.mxu0 %v135
      %435 = vmatpush.msra.mxu0 %v131
      %436 = vmatpush.msra.mxu0 %v127
      %437 = vmatpush.msra.mxu0 %v123
      %438 = vmatpush.msra.mxu0 %v119
      %439 = vmatpush.msra.mxu0 %v115
      %440 = vmatpush.msra.mxu0 %v111
      %441 = vmatpush.msra.mxu0 %v107
      %442 = vmatpush.msra.mxu0 %v103
      %443 = vmatpush.msra.mxu0 %v99
      %444 = vmatpush.msra.mxu0 %v95
      %445 = vmatmul.f32.gmra.mxu0 %v424
      %v446 = vpop.f32.mrf.mxu0
      %v447 = vadd.f32 0.0, %v446
      %448 = vdwg.mxu0
      %449 = vmatpush.msra.mxu0 %v156
      %450 = vmatpush.msra.mxu0 %v152
      %451 = vmatpush.msra.mxu0 %v148
      %452 = vmatpush.msra.mxu0 %v144
      %453 = vmatpush.msra.mxu0 %v140
      %454 = vmatpush.msra.mxu0 %v136
      %455 = vmatpush.msra.mxu0 %v132
      %456 = vmatpush.msra.mxu0 %v128
      %457 = vmatpush.msra.mxu0 %v124
      %458 = vmatpush.msra.mxu0 %v120
      %459 = vmatpush.msra.mxu0 %v116
      %460 = vmatpush.msra.mxu0 %v112
      %461 = vmatpush.msra.mxu0 %v108
      %462 = vmatpush.msra.mxu0 %v104
      %463 = vmatpush.msra.mxu0 %v100
      %464 = vmatpush.msra.mxu0 %v96
      %465 = vmatmul.f32.gmra.mxu0 %v424
      %v466 = vpop.f32.mrf.mxu0
      %v467 = vadd.f32 0.0, %v466
      %468 = vdwg.mxu0
      %469 = vmatpush.msra.mxu0 %v157
      %470 = vmatpush.msra.mxu0 %v153
      %471 = vmatpush.msra.mxu0 %v149
      %472 = vmatpush.msra.mxu0 %v145
      %473 = vmatpush.msra.mxu0 %v141
      %474 = vmatpush.msra.mxu0 %v137
      %475 = vmatpush.msra.mxu0 %v133
      %476 = vmatpush.msra.mxu0 %v129
      %477 = vmatpush.msra.mxu0 %v125
      %478 = vmatpush.msra.mxu0 %v121
      %479 = vmatpush.msra.mxu0 %v117
      %480 = vmatpush.msra.mxu0 %v113
      %481 = vmatpush.msra.mxu0 %v109
      %482 = vmatpush.msra.mxu0 %v105
      %483 = vmatpush.msra.mxu0 %v101
      %484 = vmatpush.msra.mxu0 %v97
      %485 = vmatmul.f32.gmra.mxu0 %v424
      %v486 = vpop.f32.mrf.mxu0
      %v487 = vadd.f32 0.0, %v486
      %488 = vdwg.mxu0
      %489 = vmatpush.msra.mxu0 %v158
      %490 = vmatpush.msra.mxu0 %v154
      %491 = vmatpush.msra.mxu0 %v150
      %492 = vmatpush.msra.mxu0 %v146
      %493 = vmatpush.msra.mxu0 %v142
      %494 = vmatpush.msra.mxu0 %v138
      %495 = vmatpush.msra.mxu0 %v134
      %496 = vmatpush.msra.mxu0 %v130
      %497 = vmatpush.msra.mxu0 %v126
      %498 = vmatpush.msra.mxu0 %v122
      %499 = vmatpush.msra.mxu0 %v118
      %500 = vmatpush.msra.mxu0 %v114
      %501 = vmatpush.msra.mxu0 %v110
      %502 = vmatpush.msra.mxu0 %v106
      %503 = vmatpush.msra.mxu0 %v102
      %504 = vmatpush.msra.mxu0 %v98
      %505 = vmatmul.f32.gmra.mxu0 %v424
      %v506 = vpop.f32.mrf.mxu0
      %v507 = vadd.f32 0.0, %v506
      %508 = vdwg.mxu0
      %509 = vst [vmem:[#allocation1] ss:$2 sm:$0xff] %v93
      %s510 = scalar_lea.vmem [#allocation1], 16
      %511 = vst [vmem:[%s510] ss:$2 sm:$0xff] %v94
      %v512 = vld.sshfl [vmem:[#allocation1] sm:$0xff pattern:$0x75316420]
      %v513 = vld.sshfl [vmem:[#allocation1 + $0x8] sm:$0xff pattern:$0x75316420]
      %v514 = vld.sshfl [vmem:[#allocation1 + $0x10] sm:$0xff pattern:$0x75316420]
      %v515 = vld.sshfl [vmem:[#allocation1 + $0x18] sm:$0xff pattern:$0x75316420]
      %v517 = vsel %vm248, %v428, 0
      %v519 = vsel %vm252, %v512, 0
      %v521 = vsel %vm252, %v513, 0
      %v523 = vsel %vm252, %v514, 0
      %v525 = vsel %vm252, %v515, 0
      %527 = vmatpush.msra.mxu0 0.0
      %528 = vmatpush.msra.mxu0 0.0
      %529 = vmatpush.msra.mxu0 0.0
      %530 = vmatpush.msra.mxu0 0.0
      %531 = vmatpush.msra.mxu0 0.0
      %532 = vmatpush.msra.mxu0 0.0
      %533 = vmatpush.msra.mxu0 0.0
      %534 = vmatpush.msra.mxu0 0.0
      %535 = vmatpush.msra.mxu0 0.0
      %536 = vmatpush.msra.mxu0 0.0
      %537 = vmatpush.msra.mxu0 0.0
      %538 = vmatpush.msra.mxu0 0.0
      %539 = vmatpush.msra.mxu0 0.0
      %540 = vmatpush.msra.mxu0 0.0
      %541 = vmatpush.msra.mxu0 0.0
      %542 = vmatpush.msra.mxu0 %v519
      %543 = vmatmul.f32.gmra.mxu0 %v517
      %v544 = vpop.f32.mrf.mxu0
      %v545 = vadd.f32 %v447, %v544
      %546 = vdwg.mxu0
      %547 = vmatpush.msra.mxu0 0.0
      %548 = vmatpush.msra.mxu0 0.0
      %549 = vmatpush.msra.mxu0 0.0
      %550 = vmatpush.msra.mxu0 0.0
      %551 = vmatpush.msra.mxu0 0.0
      %552 = vmatpush.msra.mxu0 0.0
      %553 = vmatpush.msra.mxu0 0.0
      %554 = vmatpush.msra.mxu0 0.0
      %555 = vmatpush.msra.mxu0 0.0
      %556 = vmatpush.msra.mxu0 0.0
      %557 = vmatpush.msra.mxu0 0.0
      %558 = vmatpush.msra.mxu0 0.0
      %559 = vmatpush.msra.mxu0 0.0
      %560 = vmatpush.msra.mxu0 0.0
      %561 = vmatpush.msra.mxu0 0.0
      %562 = vmatpush.msra.mxu0 %v521
      %563 = vmatmul.f32.gmra.mxu0 %v517
      %v564 = vpop.f32.mrf.mxu0
      %v565 = vadd.f32 %v467, %v564
      %566 = vdwg.mxu0
      %567 = vmatpush.msra.mxu0 0.0
      %568 = vmatpush.msra.mxu0 0.0
      %569 = vmatpush.msra.mxu0 0.0
      %570 = vmatpush.msra.mxu0 0.0
      %571 = vmatpush.msra.mxu0 0.0
      %572 = vmatpush.msra.mxu0 0.0
      %573 = vmatpush.msra.mxu0 0.0
      %574 = vmatpush.msra.mxu0 0.0
      %575 = vmatpush.msra.mxu0 0.0
      %576 = vmatpush.msra.mxu0 0.0
      %577 = vmatpush.msra.mxu0 0.0
      %578 = vmatpush.msra.mxu0 0.0
      %579 = vmatpush.msra.mxu0 0.0
      %580 = vmatpush.msra.mxu0 0.0
      %581 = vmatpush.msra.mxu0 0.0
      %582 = vmatpush.msra.mxu0 %v523
      %583 = vmatmul.f32.gmra.mxu0 %v517
      %v584 = vpop.f32.mrf.mxu0
      %v585 = vadd.f32 %v487, %v584
      %586 = vdwg.mxu0
      %587 = vmatpush.msra.mxu0 0.0
      %588 = vmatpush.msra.mxu0 0.0
      %589 = vmatpush.msra.mxu0 0.0
      %590 = vmatpush.msra.mxu0 0.0
      %591 = vmatpush.msra.mxu0 0.0
      %592 = vmatpush.msra.mxu0 0.0
      %593 = vmatpush.msra.mxu0 0.0
      %594 = vmatpush.msra.mxu0 0.0
      %595 = vmatpush.msra.mxu0 0.0
      %596 = vmatpush.msra.mxu0 0.0
      %597 = vmatpush.msra.mxu0 0.0
      %598 = vmatpush.msra.mxu0 0.0
      %599 = vmatpush.msra.mxu0 0.0
      %600 = vmatpush.msra.mxu0 0.0
      %601 = vmatpush.msra.mxu0 0.0
      %602 = vmatpush.msra.mxu0 %v525
      %603 = vmatmul.f32.gmra.mxu0 %v517
      %v604 = vpop.f32.mrf.mxu0
      %v605 = vadd.f32 %v507, %v604
      %606 = vdwg.mxu0
      %v607 = vadd.f32 %v545, %v342
      %v608 = vadd.f32 %v565, %v343
      %v609 = vadd.f32 %v585, %v344
      %v610 = vadd.f32 %v605, %v345
      %v611 = vxor.u32 %v607, 2147483648
      %v612 = vmul.f32 %v611, 1.442695
      %v613 = vpow.pop %v612
      %v614 = vadd.f32 %v613, 1.0
      %v615 = vrcp.pop %v614
      %v616 = vmul.f32 %v614, %v615
      %v617 = vsub.f32 1.0, %v616
      %v618 = vmul.f32 %v615, %v617
      %v619 = vadd.f32 %v615, %v618
      %vm620 = vweird.f32 %v614
      %vm621 = vweird.f32 %v615
      %vm622 = vmor %vm620, %vm621
      %v623 = vsel %vm622, %v615, %v619
      %v624 = vand.u32 2147483647, %v614
      %vm625 = vcmp.eq.f32.partialorder %v624, 8.507059e+37
      %v626 = vand.u32 %v614, 2147483648
      %v627 = vor.u32 1.1754944e-38, %v626
      %v628 = vsel %vm625, %v627, %v623
      %v629 = vmul.f32 1.0, %v628
      %v630 = vxor.u32 %v608, 2147483648
      %v631 = vmul.f32 %v630, 1.442695
      %v632 = vpow.pop %v631
      %v633 = vadd.f32 %v632, 1.0
      %v634 = vrcp.pop %v633
      %v635 = vmul.f32 %v633, %v634
      %v636 = vsub.f32 1.0, %v635
      %v637 = vmul.f32 %v634, %v636
      %v638 = vadd.f32 %v634, %v637
      %vm639 = vweird.f32 %v633
      %vm640 = vweird.f32 %v634
      %vm641 = vmor %vm639, %vm640
      %v642 = vsel %vm641, %v634, %v638
      %v643 = vand.u32 2147483647, %v633
      %vm644 = vcmp.eq.f32.partialorder %v643, 8.507059e+37
      %v645 = vand.u32 %v633, 2147483648
      %v646 = vor.u32 1.1754944e-38, %v645
      %v647 = vsel %vm644, %v646, %v642
      %v648 = vmul.f32 1.0, %v647
      %v649 = vtanh.pop %v609
      %v650 = vxor.u32 %v610, 2147483648
      %v651 = vmul.f32 %v650, 1.442695
      %v652 = vpow.pop %v651
      %v653 = vadd.f32 %v652, 1.0
      %v654 = vrcp.pop %v653
      %v655 = vmul.f32 %v653, %v654
      %v656 = vsub.f32 1.0, %v655
      %v657 = vmul.f32 %v654, %v656
      %v658 = vadd.f32 %v654, %v657
      %vm659 = vweird.f32 %v653
      %vm660 = vweird.f32 %v654
      %vm661 = vmor %vm659, %vm660
      %v662 = vsel %vm661, %v654, %v658
      %v663 = vand.u32 2147483647, %v653
      %vm664 = vcmp.eq.f32.partialorder %v663, 8.507059e+37
      %v665 = vand.u32 %v653, 2147483648
      %v666 = vor.u32 1.1754944e-38, %v665
      %v667 = vsel %vm664, %v666, %v662
      %v668 = vmul.f32 1.0, %v667
      %v669 = vmul.f32 %v648, %v425
      %v670 = vmul.f32 %v629, %v649
      %v671 = vadd.f32 %v669, %v670
      %v672 = vtanh.pop %v671
      %v673 = vmul.f32 %v668, %v672
      %v674 = vstv %s426
      %vm675 = vcmp.lt.s32.totalorder %v674, %v87
      %v676 = vsel %vm675, 1, 0
      %677 = vset.pattern.permute.xlu0 0
      %678 = vperm.xlu0 %677, %v676
      %v679 = vpop.permute.xlu0 %678
      %vm680 = vcmp.eq.s32.totalorder %v679, 1
      %v681 = vsel %vm680, %v673, %v424
      %v682 = vsel %vm680, %v671, %v425
      %s683 = sadd.s32 %s91, 2
      %s684 = scalar_lea.vmem %s70, 4
      %v685 = vld [vmem:[%s684] sm:$0x3]
      %686 = vmatpush.msra.mxu0 %v155
      %687 = vmatpush.msra.mxu0 %v151
      %688 = vmatpush.msra.mxu0 %v147
      %689 = vmatpush.msra.mxu0 %v143
      %690 = vmatpush.msra.mxu0 %v139
      %691 = vmatpush.msra.mxu0 %v135
      %692 = vmatpush.msra.mxu0 %v131
      %693 = vmatpush.msra.mxu0 %v127
      %694 = vmatpush.msra.mxu0 %v123
      %695 = vmatpush.msra.mxu0 %v119
      %696 = vmatpush.msra.mxu0 %v115
      %697 = vmatpush.msra.mxu0 %v111
      %698 = vmatpush.msra.mxu0 %v107
      %699 = vmatpush.msra.mxu0 %v103
      %700 = vmatpush.msra.mxu0 %v99
      %701 = vmatpush.msra.mxu0 %v95
      %702 = vmatmul.f32.gmra.mxu0 %v681
      %v703 = vpop.f32.mrf.mxu0
      %v704 = vadd.f32 0.0, %v703
      %705 = vdwg.mxu0
      %706 = vmatpush.msra.mxu0 %v156
      %707 = vmatpush.msra.mxu0 %v152
      %708 = vmatpush.msra.mxu0 %v148
      %709 = vmatpush.msra.mxu0 %v144
      %710 = vmatpush.msra.mxu0 %v140
      %711 = vmatpush.msra.mxu0 %v136
      %712 = vmatpush.msra.mxu0 %v132
      %713 = vmatpush.msra.mxu0 %v128
      %714 = vmatpush.msra.mxu0 %v124
      %715 = vmatpush.msra.mxu0 %v120
      %716 = vmatpush.msra.mxu0 %v116
      %717 = vmatpush.msra.mxu0 %v112
      %718 = vmatpush.msra.mxu0 %v108
      %719 = vmatpush.msra.mxu0 %v104
      %720 = vmatpush.msra.mxu0 %v100
      %721 = vmatpush.msra.mxu0 %v96
      %722 = vmatmul.f32.gmra.mxu0 %v681
      %v723 = vpop.f32.mrf.mxu0
      %v724 = vadd.f32 0.0, %v723
      %725 = vdwg.mxu0
      %726 = vmatpush.msra.mxu0 %v157
      %727 = vmatpush.msra.mxu0 %v153
      %728 = vmatpush.msra.mxu0 %v149
      %729 = vmatpush.msra.mxu0 %v145
      %730 = vmatpush.msra.mxu0 %v141
      %731 = vmatpush.msra.mxu0 %v137
      %732 = vmatpush.msra.mxu0 %v133
      %733 = vmatpush.msra.mxu0 %v129
      %734 = vmatpush.msra.mxu0 %v125
      %735 = vmatpush.msra.mxu0 %v121
      %736 = vmatpush.msra.mxu0 %v117
      %737 = vmatpush.msra.mxu0 %v113
      %738 = vmatpush.msra.mxu0 %v109
      %739 = vmatpush.msra.mxu0 %v105
      %740 = vmatpush.msra.mxu0 %v101
      %741 = vmatpush.msra.mxu0 %v97
      %742 = vmatmul.f32.gmra.mxu0 %v681
      %v743 = vpop.f32.mrf.mxu0
      %v744 = vadd.f32 0.0, %v743
      %745 = vdwg.mxu0
      %746 = vmatpush.msra.mxu0 %v158
      %747 = vmatpush.msra.mxu0 %v154
      %748 = vmatpush.msra.mxu0 %v150
      %749 = vmatpush.msra.mxu0 %v146
      %750 = vmatpush.msra.mxu0 %v142
      %751 = vmatpush.msra.mxu0 %v138
      %752 = vmatpush.msra.mxu0 %v134
      %753 = vmatpush.msra.mxu0 %v130
      %754 = vmatpush.msra.mxu0 %v126
      %755 = vmatpush.msra.mxu0 %v122
      %756 = vmatpush.msra.mxu0 %v118
      %757 = vmatpush.msra.mxu0 %v114
      %758 = vmatpush.msra.mxu0 %v110
      %759 = vmatpush.msra.mxu0 %v106
      %760 = vmatpush.msra.mxu0 %v102
      %761 = vmatpush.msra.mxu0 %v98
      %762 = vmatmul.f32.gmra.mxu0 %v681
      %v763 = vpop.f32.mrf.mxu0
      %v764 = vadd.f32 0.0, %v763
      %765 = vdwg.mxu0
      %766 = vst [vmem:[#allocation1] ss:$2 sm:$0xff] %v93
      %s767 = scalar_lea.vmem [#allocation1], 16
      %768 = vst [vmem:[%s767] ss:$2 sm:$0xff] %v94
      %v769 = vld.sshfl [vmem:[#allocation1] sm:$0xff pattern:$0x75316420]
      %v770 = vld.sshfl [vmem:[#allocation1 + $0x8] sm:$0xff pattern:$0x75316420]
      %v771 = vld.sshfl [vmem:[#allocation1 + $0x10] sm:$0xff pattern:$0x75316420]
      %v772 = vld.sshfl [vmem:[#allocation1 + $0x18] sm:$0xff pattern:$0x75316420]
      %v774 = vsel %vm248, %v685, 0
      %v776 = vsel %vm252, %v769, 0
      %v778 = vsel %vm252, %v770, 0
      %v780 = vsel %vm252, %v771, 0
      %v782 = vsel %vm252, %v772, 0
      %784 = vmatpush.msra.mxu0 0.0
      %785 = vmatpush.msra.mxu0 0.0
      %786 = vmatpush.msra.mxu0 0.0
      %787 = vmatpush.msra.mxu0 0.0
      %788 = vmatpush.msra.mxu0 0.0
      %789 = vmatpush.msra.mxu0 0.0
      %790 = vmatpush.msra.mxu0 0.0
      %791 = vmatpush.msra.mxu0 0.0
      %792 = vmatpush.msra.mxu0 0.0
      %793 = vmatpush.msra.mxu0 0.0
      %794 = vmatpush.msra.mxu0 0.0
      %795 = vmatpush.msra.mxu0 0.0
      %796 = vmatpush.msra.mxu0 0.0
      %797 = vmatpush.msra.mxu0 0.0
      %798 = vmatpush.msra.mxu0 0.0
      %799 = vmatpush.msra.mxu0 %v776
      %800 = vmatmul.f32.gmra.mxu0 %v774
      %v801 = vpop.f32.mrf.mxu0
      %v802 = vadd.f32 %v704, %v801
      %803 = vdwg.mxu0
      %804 = vmatpush.msra.mxu0 0.0
      %805 = vmatpush.msra.mxu0 0.0
      %806 = vmatpush.msra.mxu0 0.0
      %807 = vmatpush.msra.mxu0 0.0
      %808 = vmatpush.msra.mxu0 0.0
      %809 = vmatpush.msra.mxu0 0.0
      %810 = vmatpush.msra.mxu0 0.0
      %811 = vmatpush.msra.mxu0 0.0
      %812 = vmatpush.msra.mxu0 0.0
      %813 = vmatpush.msra.mxu0 0.0
      %814 = vmatpush.msra.mxu0 0.0
      %815 = vmatpush.msra.mxu0 0.0
      %816 = vmatpush.msra.mxu0 0.0
      %817 = vmatpush.msra.mxu0 0.0
      %818 = vmatpush.msra.mxu0 0.0
      %819 = vmatpush.msra.mxu0 %v778
      %820 = vmatmul.f32.gmra.mxu0 %v774
      %v821 = vpop.f32.mrf.mxu0
      %v822 = vadd.f32 %v724, %v821
      %823 = vdwg.mxu0
      %824 = vmatpush.msra.mxu0 0.0
      %825 = vmatpush.msra.mxu0 0.0
      %826 = vmatpush.msra.mxu0 0.0
      %827 = vmatpush.msra.mxu0 0.0
      %828 = vmatpush.msra.mxu0 0.0
      %829 = vmatpush.msra.mxu0 0.0
      %830 = vmatpush.msra.mxu0 0.0
      %831 = vmatpush.msra.mxu0 0.0
      %832 = vmatpush.msra.mxu0 0.0
      %833 = vmatpush.msra.mxu0 0.0
      %834 = vmatpush.msra.mxu0 0.0
      %835 = vmatpush.msra.mxu0 0.0
      %836 = vmatpush.msra.mxu0 0.0
      %837 = vmatpush.msra.mxu0 0.0
      %838 = vmatpush.msra.mxu0 0.0
      %839 = vmatpush.msra.mxu0 %v780
      %840 = vmatmul.f32.gmra.mxu0 %v774
      %v841 = vpop.f32.mrf.mxu0
      %v842 = vadd.f32 %v744, %v841
      %843 = vdwg.mxu0
      %844 = vmatpush.msra.mxu0 0.0
      %845 = vmatpush.msra.mxu0 0.0
      %846 = vmatpush.msra.mxu0 0.0
      %847 = vmatpush.msra.mxu0 0.0
      %848 = vmatpush.msra.mxu0 0.0
      %849 = vmatpush.msra.mxu0 0.0
      %850 = vmatpush.msra.mxu0 0.0
      %851 = vmatpush.msra.mxu0 0.0
      %852 = vmatpush.msra.mxu0 0.0
      %853 = vmatpush.msra.mxu0 0.0
      %854 = vmatpush.msra.mxu0 0.0
      %855 = vmatpush.msra.mxu0 0.0
      %856 = vmatpush.msra.mxu0 0.0
      %857 = vmatpush.msra.mxu0 0.0
      %858 = vmatpush.msra.mxu0 0.0
      %859 = vmatpush.msra.mxu0 %v782
      %860 = vmatmul.f32.gmra.mxu0 %v774
      %v861 = vpop.f32.mrf.mxu0
      %v862 = vadd.f32 %v764, %v861
      %863 = vdwg.mxu0
      %v864 = vadd.f32 %v802, %v342
      %v865 = vadd.f32 %v822, %v343
      %v866 = vadd.f32 %v842, %v344
      %v867 = vadd.f32 %v862, %v345
      %v868 = vxor.u32 %v864, 2147483648
      %v869 = vmul.f32 %v868, 1.442695
      %v870 = vpow.pop %v869
      %v871 = vadd.f32 %v870, 1.0
      %v872 = vrcp.pop %v871
      %v873 = vmul.f32 %v871, %v872
      %v874 = vsub.f32 1.0, %v873
      %v875 = vmul.f32 %v872, %v874
      %v876 = vadd.f32 %v872, %v875
      %vm877 = vweird.f32 %v871
      %vm878 = vweird.f32 %v872
      %vm879 = vmor %vm877, %vm878
      %v880 = vsel %vm879, %v872, %v876
      %v881 = vand.u32 2147483647, %v871
      %vm882 = vcmp.eq.f32.partialorder %v881, 8.507059e+37
      %v883 = vand.u32 %v871, 2147483648
      %v884 = vor.u32 1.1754944e-38, %v883
      %v885 = vsel %vm882, %v884, %v880
      %v886 = vmul.f32 1.0, %v885
      %v887 = vxor.u32 %v865, 2147483648
      %v888 = vmul.f32 %v887, 1.442695
      %v889 = vpow.pop %v888
      %v890 = vadd.f32 %v889, 1.0
      %v891 = vrcp.pop %v890
      %v892 = vmul.f32 %v890, %v891
      %v893 = vsub.f32 1.0, %v892
      %v894 = vmul.f32 %v891, %v893
      %v895 = vadd.f32 %v891, %v894
      %vm896 = vweird.f32 %v890
      %vm897 = vweird.f32 %v891
      %vm898 = vmor %vm896, %vm897
      %v899 = vsel %vm898, %v891, %v895
      %v900 = vand.u32 2147483647, %v890
      %vm901 = vcmp.eq.f32.partialorder %v900, 8.507059e+37
      %v902 = vand.u32 %v890, 2147483648
      %v903 = vor.u32 1.1754944e-38, %v902
      %v904 = vsel %vm901, %v903, %v899
      %v905 = vmul.f32 1.0, %v904
      %v906 = vtanh.pop %v866
      %v907 = vxor.u32 %v867, 2147483648
      %v908 = vmul.f32 %v907, 1.442695
      %v909 = vpow.pop %v908
      %v910 = vadd.f32 %v909, 1.0
      %v911 = vrcp.pop %v910
      %v912 = vmul.f32 %v910, %v911
      %v913 = vsub.f32 1.0, %v912
      %v914 = vmul.f32 %v911, %v913
      %v915 = vadd.f32 %v911, %v914
      %vm916 = vweird.f32 %v910
      %vm917 = vweird.f32 %v911
      %vm918 = vmor %vm916, %vm917
      %v919 = vsel %vm918, %v911, %v915
      %v920 = vand.u32 2147483647, %v910
      %vm921 = vcmp.eq.f32.partialorder %v920, 8.507059e+37
      %v922 = vand.u32 %v910, 2147483648
      %v923 = vor.u32 1.1754944e-38, %v922
      %v924 = vsel %vm921, %v923, %v919
      %v925 = vmul.f32 1.0, %v924
      %v926 = vmul.f32 %v905, %v682
      %v927 = vmul.f32 %v886, %v906
      %v928 = vadd.f32 %v926, %v927
      %v929 = vtanh.pop %v928
      %v930 = vmul.f32 %v925, %v929
      %v931 = vstv %s683
      %vm932 = vcmp.lt.s32.totalorder %v931, %v87
      %v933 = vsel %vm932, 1, 0
      %934 = vset.pattern.permute.xlu0 0
      %935 = vperm.xlu0 %934, %v933
      %v936 = vpop.permute.xlu0 %935
      %vm937 = vcmp.eq.s32.totalorder %v936, 1
      %v938 = vsel %vm937, %v930, %v681
      %v939 = vsel %vm937, %v928, %v682
      %s940 = sadd.s32 %s91, 3
      %s941 = scalar_lea.vmem %s70, 6
      %v942 = vld [vmem:[%s941] sm:$0x3]
      %943 = vmatpush.msra.mxu0 %v155
      %944 = vmatpush.msra.mxu0 %v151
      %945 = vmatpush.msra.mxu0 %v147
      %946 = vmatpush.msra.mxu0 %v143
      %947 = vmatpush.msra.mxu0 %v139
      %948 = vmatpush.msra.mxu0 %v135
      %949 = vmatpush.msra.mxu0 %v131
      %950 = vmatpush.msra.mxu0 %v127
      %951 = vmatpush.msra.mxu0 %v123
      %952 = vmatpush.msra.mxu0 %v119
      %953 = vmatpush.msra.mxu0 %v115
      %954 = vmatpush.msra.mxu0 %v111
      %955 = vmatpush.msra.mxu0 %v107
      %956 = vmatpush.msra.mxu0 %v103
      %957 = vmatpush.msra.mxu0 %v99
      %958 = vmatpush.msra.mxu0 %v95
      %959 = vmatmul.f32.gmra.mxu0 %v938
      %v960 = vpop.f32.mrf.mxu0
      %v961 = vadd.f32 0.0, %v960
      %962 = vdwg.mxu0
      %963 = vmatpush.msra.mxu0 %v156
      %964 = vmatpush.msra.mxu0 %v152
      %965 = vmatpush.msra.mxu0 %v148
      %966 = vmatpush.msra.mxu0 %v144
      %967 = vmatpush.msra.mxu0 %v140
      %968 = vmatpush.msra.mxu0 %v136
      %969 = vmatpush.msra.mxu0 %v132
      %970 = vmatpush.msra.mxu0 %v128
      %971 = vmatpush.msra.mxu0 %v124
      %972 = vmatpush.msra.mxu0 %v120
      %973 = vmatpush.msra.mxu0 %v116
      %974 = vmatpush.msra.mxu0 %v112
      %975 = vmatpush.msra.mxu0 %v108
      %976 = vmatpush.msra.mxu0 %v104
      %977 = vmatpush.msra.mxu0 %v100
      %978 = vmatpush.msra.mxu0 %v96
      %979 = vmatmul.f32.gmra.mxu0 %v938
      %v980 = vpop.f32.mrf.mxu0
      %v981 = vadd.f32 0.0, %v980
      %982 = vdwg.mxu0
      %983 = vmatpush.msra.mxu0 %v157
      %984 = vmatpush.msra.mxu0 %v153
      %985 = vmatpush.msra.mxu0 %v149
      %986 = vmatpush.msra.mxu0 %v145
      %987 = vmatpush.msra.mxu0 %v141
      %988 = vmatpush.msra.mxu0 %v137
      %989 = vmatpush.msra.mxu0 %v133
      %990 = vmatpush.msra.mxu0 %v129
      %991 = vmatpush.msra.mxu0 %v125
      %992 = vmatpush.msra.mxu0 %v121
      %993 = vmatpush.msra.mxu0 %v117
      %994 = vmatpush.msra.mxu0 %v113
      %995 = vmatpush.msra.mxu0 %v109
      %996 = vmatpush.msra.mxu0 %v105
      %997 = vmatpush.msra.mxu0 %v101
      %998 = vmatpush.msra.mxu0 %v97
      %999 = vmatmul.f32.gmra.mxu0 %v938
      %v1000 = vpop.f32.mrf.mxu0
      %v1001 = vadd.f32 0.0, %v1000
      %1002 = vdwg.mxu0
      %1003 = vmatpush.msra.mxu0 %v158
      %1004 = vmatpush.msra.mxu0 %v154
      %1005 = vmatpush.msra.mxu0 %v150
      %1006 = vmatpush.msra.mxu0 %v146
      %1007 = vmatpush.msra.mxu0 %v142
      %1008 = vmatpush.msra.mxu0 %v138
      %1009 = vmatpush.msra.mxu0 %v134
      %1010 = vmatpush.msra.mxu0 %v130
      %1011 = vmatpush.msra.mxu0 %v126
      %1012 = vmatpush.msra.mxu0 %v122
      %1013 = vmatpush.msra.mxu0 %v118
      %1014 = vmatpush.msra.mxu0 %v114
      %1015 = vmatpush.msra.mxu0 %v110
      %1016 = vmatpush.msra.mxu0 %v106
      %1017 = vmatpush.msra.mxu0 %v102
      %1018 = vmatpush.msra.mxu0 %v98
      %1019 = vmatmul.f32.gmra.mxu0 %v938
      %v1020 = vpop.f32.mrf.mxu0
      %v1021 = vadd.f32 0.0, %v1020
      %1022 = vdwg.mxu0
      %1023 = vst [vmem:[#allocation1] ss:$2 sm:$0xff] %v93
      %s1024 = scalar_lea.vmem [#allocation1], 16
      %1025 = vst [vmem:[%s1024] ss:$2 sm:$0xff] %v94
      %v1026 = vld.sshfl [vmem:[#allocation1] sm:$0xff pattern:$0x75316420]
      %v1027 = vld.sshfl [vmem:[#allocation1 + $0x8] sm:$0xff pattern:$0x75316420]
      %v1028 = vld.sshfl [vmem:[#allocation1 + $0x10] sm:$0xff pattern:$0x75316420]
      %v1029 = vld.sshfl [vmem:[#allocation1 + $0x18] sm:$0xff pattern:$0x75316420]
      %v1031 = vsel %vm248, %v942, 0
      %v1033 = vsel %vm252, %v1026, 0
      %v1035 = vsel %vm252, %v1027, 0
      %v1037 = vsel %vm252, %v1028, 0
      %v1039 = vsel %vm252, %v1029, 0
      %1041 = vmatpush.msra.mxu0 0.0
      %1042 = vmatpush.msra.mxu0 0.0
      %1043 = vmatpush.msra.mxu0 0.0
      %1044 = vmatpush.msra.mxu0 0.0
      %1045 = vmatpush.msra.mxu0 0.0
      %1046 = vmatpush.msra.mxu0 0.0
      %1047 = vmatpush.msra.mxu0 0.0
      %1048 = vmatpush.msra.mxu0 0.0
      %1049 = vmatpush.msra.mxu0 0.0
      %1050 = vmatpush.msra.mxu0 0.0
      %1051 = vmatpush.msra.mxu0 0.0
      %1052 = vmatpush.msra.mxu0 0.0
      %1053 = vmatpush.msra.mxu0 0.0
      %1054 = vmatpush.msra.mxu0 0.0
      %1055 = vmatpush.msra.mxu0 0.0
      %1056 = vmatpush.msra.mxu0 %v1033
      %1057 = vmatmul.f32.gmra.mxu0 %v1031
      %v1058 = vpop.f32.mrf.mxu0
      %v1059 = vadd.f32 %v961, %v1058
      %1060 = vdwg.mxu0
      %1061 = vmatpush.msra.mxu0 0.0
      %1062 = vmatpush.msra.mxu0 0.0
      %1063 = vmatpush.msra.mxu0 0.0
      %1064 = vmatpush.msra.mxu0 0.0
      %1065 = vmatpush.msra.mxu0 0.0
      %1066 = vmatpush.msra.mxu0 0.0
      %1067 = vmatpush.msra.mxu0 0.0
      %1068 = vmatpush.msra.mxu0 0.0
      %1069 = vmatpush.msra.mxu0 0.0
      %1070 = vmatpush.msra.mxu0 0.0
      %1071 = vmatpush.msra.mxu0 0.0
      %1072 = vmatpush.msra.mxu0 0.0
      %1073 = vmatpush.msra.mxu0 0.0
      %1074 = vmatpush.msra.mxu0 0.0
      %1075 = vmatpush.msra.mxu0 0.0
      %1076 = vmatpush.msra.mxu0 %v1035
      %1077 = vmatmul.f32.gmra.mxu0 %v1031
      %v1078 = vpop.f32.mrf.mxu0
      %v1079 = vadd.f32 %v981, %v1078
      %1080 = vdwg.mxu0
      %1081 = vmatpush.msra.mxu0 0.0
      %1082 = vmatpush.msra.mxu0 0.0
      %1083 = vmatpush.msra.mxu0 0.0
      %1084 = vmatpush.msra.mxu0 0.0
      %1085 = vmatpush.msra.mxu0 0.0
      %1086 = vmatpush.msra.mxu0 0.0
      %1087 = vmatpush.msra.mxu0 0.0
      %1088 = vmatpush.msra.mxu0 0.0
      %1089 = vmatpush.msra.mxu0 0.0
      %1090 = vmatpush.msra.mxu0 0.0
      %1091 = vmatpush.msra.mxu0 0.0
      %1092 = vmatpush.msra.mxu0 0.0
      %1093 = vmatpush.msra.mxu0 0.0
      %1094 = vmatpush.msra.mxu0 0.0
      %1095 = vmatpush.msra.mxu0 0.0
      %1096 = vmatpush.msra.mxu0 %v1037
      %1097 = vmatmul.f32.gmra.mxu0 %v1031
      %v1098 = vpop.f32.mrf.mxu0
      %v1099 = vadd.f32 %v1001, %v1098
      %1100 = vdwg.mxu0
      %1101 = vmatpush.msra.mxu0 0.0
      %1102 = vmatpush.msra.mxu0 0.0
      %1103 = vmatpush.msra.mxu0 0.0
      %1104 = vmatpush.msra.mxu0 0.0
      %1105 = vmatpush.msra.mxu0 0.0
      %1106 = vmatpush.msra.mxu0 0.0
      %1107 = vmatpush.msra.mxu0 0.0
      %1108 = vmatpush.msra.mxu0 0.0
      %1109 = vmatpush.msra.mxu0 0.0
      %1110 = vmatpush.msra.mxu0 0.0
      %1111 = vmatpush.msra.mxu0 0.0
      %1112 = vmatpush.msra.mxu0 0.0
      %1113 = vmatpush.msra.mxu0 0.0
      %1114 = vmatpush.msra.mxu0 0.0
      %1115 = vmatpush.msra.mxu0 0.0
      %1116 = vmatpush.msra.mxu0 %v1039
      %1117 = vmatmul.f32.gmra.mxu0 %v1031
      %v1118 = vpop.f32.mrf.mxu0
      %v1119 = vadd.f32 %v1021, %v1118
      %1120 = vdwg.mxu0
      %v1121 = vadd.f32 %v1059, %v342
      %v1122 = vadd.f32 %v1079, %v343
      %v1123 = vadd.f32 %v1099, %v344
      %v1124 = vadd.f32 %v1119, %v345
      %v1125 = vxor.u32 %v1121, 2147483648
      %v1126 = vmul.f32 %v1125, 1.442695
      %v1127 = vpow.pop %v1126
      %v1128 = vadd.f32 %v1127, 1.0
      %v1129 = vrcp.pop %v1128
      %v1130 = vmul.f32 %v1128, %v1129
      %v1131 = vsub.f32 1.0, %v1130
      %v1132 = vmul.f32 %v1129, %v1131
      %v1133 = vadd.f32 %v1129, %v1132
      %vm1134 = vweird.f32 %v1128
      %vm1135 = vweird.f32 %v1129
      %vm1136 = vmor %vm1134, %vm1135
      %v1137 = vsel %vm1136, %v1129, %v1133
      %v1138 = vand.u32 2147483647, %v1128
      %vm1139 = vcmp.eq.f32.partialorder %v1138, 8.507059e+37
      %v1140 = vand.u32 %v1128, 2147483648
      %v1141 = vor.u32 1.1754944e-38, %v1140
      %v1142 = vsel %vm1139, %v1141, %v1137
      %v1143 = vmul.f32 1.0, %v1142
      %v1144 = vxor.u32 %v1122, 2147483648
      %v1145 = vmul.f32 %v1144, 1.442695
      %v1146 = vpow.pop %v1145
      %v1147 = vadd.f32 %v1146, 1.0
      %v1148 = vrcp.pop %v1147
      %v1149 = vmul.f32 %v1147, %v1148
      %v1150 = vsub.f32 1.0, %v1149
      %v1151 = vmul.f32 %v1148, %v1150
      %v1152 = vadd.f32 %v1148, %v1151
      %vm1153 = vweird.f32 %v1147
      %vm1154 = vweird.f32 %v1148
      %vm1155 = vmor %vm1153, %vm1154
      %v1156 = vsel %vm1155, %v1148, %v1152
      %v1157 = vand.u32 2147483647, %v1147
      %vm1158 = vcmp.eq.f32.partialorder %v1157, 8.507059e+37
      %v1159 = vand.u32 %v1147, 2147483648
      %v1160 = vor.u32 1.1754944e-38, %v1159
      %v1161 = vsel %vm1158, %v1160, %v1156
      %v1162 = vmul.f32 1.0, %v1161
      %v1163 = vtanh.pop %v1123
      %v1164 = vxor.u32 %v1124, 2147483648
      %v1165 = vmul.f32 %v1164, 1.442695
      %v1166 = vpow.pop %v1165
      %v1167 = vadd.f32 %v1166, 1.0
      %v1168 = vrcp.pop %v1167
      %v1169 = vmul.f32 %v1167, %v1168
      %v1170 = vsub.f32 1.0, %v1169
      %v1171 = vmul.f32 %v1168, %v1170
      %v1172 = vadd.f32 %v1168, %v1171
      %vm1173 = vweird.f32 %v1167
      %vm1174 = vweird.f32 %v1168
      %vm1175 = vmor %vm1173, %vm1174
      %v1176 = vsel %vm1175, %v1168, %v1172
      %v1177 = vand.u32 2147483647, %v1167
      %vm1178 = vcmp.eq.f32.partialorder %v1177, 8.507059e+37
      %v1179 = vand.u32 %v1167, 2147483648
      %v1180 = vor.u32 1.1754944e-38, %v1179
      %v1181 = vsel %vm1178, %v1180, %v1176
      %v1182 = vmul.f32 1.0, %v1181
      %v1183 = vmul.f32 %v1162, %v939
      %v1184 = vmul.f32 %v1143, %v1163
      %v1185 = vadd.f32 %v1183, %v1184
      %v1186 = vtanh.pop %v1185
      %v1187 = vmul.f32 %v1182, %v1186
      %v1188 = vstv %s940
      %vm1189 = vcmp.lt.s32.totalorder %v1188, %v87
      %v1190 = vsel %vm1189, 1, 0
      %1191 = vset.pattern.permute.xlu0 0
      %1192 = vperm.xlu0 %1191, %v1190
      %v1193 = vpop.permute.xlu0 %1192
      %vm1194 = vcmp.eq.s32.totalorder %v1193, 1
      %v1195 = vsel %vm1194, %v1187, %v938
      %v1196 = vsel %vm1194, %v1185, %v939
      %s1197 = sadd.s32 %s91, 4
      %s1198 = scalar_lea.vmem %s70, 8
      %v1199 = vld [vmem:[%s1198] sm:$0x3]
      %1200 = vmatpush.msra.mxu0 %v155
      %1201 = vmatpush.msra.mxu0 %v151
      %1202 = vmatpush.msra.mxu0 %v147
      %1203 = vmatpush.msra.mxu0 %v143
      %1204 = vmatpush.msra.mxu0 %v139
      %1205 = vmatpush.msra.mxu0 %v135
      %1206 = vmatpush.msra.mxu0 %v131
      %1207 = vmatpush.msra.mxu0 %v127
      %1208 = vmatpush.msra.mxu0 %v123
      %1209 = vmatpush.msra.mxu0 %v119
      %1210 = vmatpush.msra.mxu0 %v115
      %1211 = vmatpush.msra.mxu0 %v111
      %1212 = vmatpush.msra.mxu0 %v107
      %1213 = vmatpush.msra.mxu0 %v103
      %1214 = vmatpush.msra.mxu0 %v99
      %1215 = vmatpush.msra.mxu0 %v95
      %1216 = vmatmul.f32.gmra.mxu0 %v1195
      %v1217 = vpop.f32.mrf.mxu0
      %v1218 = vadd.f32 0.0, %v1217
      %1219 = vdwg.mxu0
      %1220 = vmatpush.msra.mxu0 %v156
      %1221 = vmatpush.msra.mxu0 %v152
      %1222 = vmatpush.msra.mxu0 %v148
      %1223 = vmatpush.msra.mxu0 %v144
      %1224 = vmatpush.msra.mxu0 %v140
      %1225 = vmatpush.msra.mxu0 %v136
      %1226 = vmatpush.msra.mxu0 %v132
      %1227 = vmatpush.msra.mxu0 %v128
      %1228 = vmatpush.msra.mxu0 %v124
      %1229 = vmatpush.msra.mxu0 %v120
      %1230 = vmatpush.msra.mxu0 %v116
      %1231 = vmatpush.msra.mxu0 %v112
      %1232 = vmatpush.msra.mxu0 %v108
      %1233 = vmatpush.msra.mxu0 %v104
      %1234 = vmatpush.msra.mxu0 %v100
      %1235 = vmatpush.msra.mxu0 %v96
      %1236 = vmatmul.f32.gmra.mxu0 %v1195
      %v1237 = vpop.f32.mrf.mxu0
      %v1238 = vadd.f32 0.0, %v1237
      %1239 = vdwg.mxu0
      %1240 = vmatpush.msra.mxu0 %v157
      %1241 = vmatpush.msra.mxu0 %v153
      %1242 = vmatpush.msra.mxu0 %v149
      %1243 = vmatpush.msra.mxu0 %v145
      %1244 = vmatpush.msra.mxu0 %v141
      %1245 = vmatpush.msra.mxu0 %v137
      %1246 = vmatpush.msra.mxu0 %v133
      %1247 = vmatpush.msra.mxu0 %v129
      %1248 = vmatpush.msra.mxu0 %v125
      %1249 = vmatpush.msra.mxu0 %v121
      %1250 = vmatpush.msra.mxu0 %v117
      %1251 = vmatpush.msra.mxu0 %v113
      %1252 = vmatpush.msra.mxu0 %v109
      %1253 = vmatpush.msra.mxu0 %v105
      %1254 = vmatpush.msra.mxu0 %v101
      %1255 = vmatpush.msra.mxu0 %v97
      %1256 = vmatmul.f32.gmra.mxu0 %v1195
      %v1257 = vpop.f32.mrf.mxu0
      %v1258 = vadd.f32 0.0, %v1257
      %1259 = vdwg.mxu0
      %1260 = vmatpush.msra.mxu0 %v158
      %1261 = vmatpush.msra.mxu0 %v154
      %1262 = vmatpush.msra.mxu0 %v150
      %1263 = vmatpush.msra.mxu0 %v146
      %1264 = vmatpush.msra.mxu0 %v142
      %1265 = vmatpush.msra.mxu0 %v138
      %1266 = vmatpush.msra.mxu0 %v134
      %1267 = vmatpush.msra.mxu0 %v130
      %1268 = vmatpush.msra.mxu0 %v126
      %1269 = vmatpush.msra.mxu0 %v122
      %1270 = vmatpush.msra.mxu0 %v118
      %1271 = vmatpush.msra.mxu0 %v114
      %1272 = vmatpush.msra.mxu0 %v110
      %1273 = vmatpush.msra.mxu0 %v106
      %1274 = vmatpush.msra.mxu0 %v102
      %1275 = vmatpush.msra.mxu0 %v98
      %1276 = vmatmul.f32.gmra.mxu0 %v1195
      %v1277 = vpop.f32.mrf.mxu0
      %v1278 = vadd.f32 0.0, %v1277
      %1279 = vdwg.mxu0
      %1280 = vst [vmem:[#allocation1] ss:$2 sm:$0xff] %v93
      %s1281 = scalar_lea.vmem [#allocation1], 16
      %1282 = vst [vmem:[%s1281] ss:$2 sm:$0xff] %v94
      %v1283 = vld.sshfl [vmem:[#allocation1] sm:$0xff pattern:$0x75316420]
      %v1284 = vld.sshfl [vmem:[#allocation1 + $0x8] sm:$0xff pattern:$0x75316420]
      %v1285 = vld.sshfl [vmem:[#allocation1 + $0x10] sm:$0xff pattern:$0x75316420]
      %v1286 = vld.sshfl [vmem:[#allocation1 + $0x18] sm:$0xff pattern:$0x75316420]
      %v1288 = vsel %vm248, %v1199, 0
      %v1290 = vsel %vm252, %v1283, 0
      %v1292 = vsel %vm252, %v1284, 0
      %v1294 = vsel %vm252, %v1285, 0
      %v1296 = vsel %vm252, %v1286, 0
      %1298 = vmatpush.msra.mxu0 0.0
      %1299 = vmatpush.msra.mxu0 0.0
      %1300 = vmatpush.msra.mxu0 0.0
      %1301 = vmatpush.msra.mxu0 0.0
      %1302 = vmatpush.msra.mxu0 0.0
      %1303 = vmatpush.msra.mxu0 0.0
      %1304 = vmatpush.msra.mxu0 0.0
      %1305 = vmatpush.msra.mxu0 0.0
      %1306 = vmatpush.msra.mxu0 0.0
      %1307 = vmatpush.msra.mxu0 0.0
      %1308 = vmatpush.msra.mxu0 0.0
      %1309 = vmatpush.msra.mxu0 0.0
      %1310 = vmatpush.msra.mxu0 0.0
      %1311 = vmatpush.msra.mxu0 0.0
      %1312 = vmatpush.msra.mxu0 0.0
      %1313 = vmatpush.msra.mxu0 %v1290
      %1314 = vmatmul.f32.gmra.mxu0 %v1288
      %v1315 = vpop.f32.mrf.mxu0
      %v1316 = vadd.f32 %v1218, %v1315
      %1317 = vdwg.mxu0
      %1318 = vmatpush.msra.mxu0 0.0
      %1319 = vmatpush.msra.mxu0 0.0
      %1320 = vmatpush.msra.mxu0 0.0
      %1321 = vmatpush.msra.mxu0 0.0
      %1322 = vmatpush.msra.mxu0 0.0
      %1323 = vmatpush.msra.mxu0 0.0
      %1324 = vmatpush.msra.mxu0 0.0
      %1325 = vmatpush.msra.mxu0 0.0
      %1326 = vmatpush.msra.mxu0 0.0
      %1327 = vmatpush.msra.mxu0 0.0
      %1328 = vmatpush.msra.mxu0 0.0
      %1329 = vmatpush.msra.mxu0 0.0
      %1330 = vmatpush.msra.mxu0 0.0
      %1331 = vmatpush.msra.mxu0 0.0
      %1332 = vmatpush.msra.mxu0 0.0
      %1333 = vmatpush.msra.mxu0 %v1292
      %1334 = vmatmul.f32.gmra.mxu0 %v1288
      %v1335 = vpop.f32.mrf.mxu0
      %v1336 = vadd.f32 %v1238, %v1335
      %1337 = vdwg.mxu0
      %1338 = vmatpush.msra.mxu0 0.0
      %1339 = vmatpush.msra.mxu0 0.0
      %1340 = vmatpush.msra.mxu0 0.0
      %1341 = vmatpush.msra.mxu0 0.0
      %1342 = vmatpush.msra.mxu0 0.0
      %1343 = vmatpush.msra.mxu0 0.0
      %1344 = vmatpush.msra.mxu0 0.0
      %1345 = vmatpush.msra.mxu0 0.0
      %1346 = vmatpush.msra.mxu0 0.0
      %1347 = vmatpush.msra.mxu0 0.0
      %1348 = vmatpush.msra.mxu0 0.0
      %1349 = vmatpush.msra.mxu0 0.0
      %1350 = vmatpush.msra.mxu0 0.0
      %1351 = vmatpush.msra.mxu0 0.0
      %1352 = vmatpush.msra.mxu0 0.0
      %1353 = vmatpush.msra.mxu0 %v1294
      %1354 = vmatmul.f32.gmra.mxu0 %v1288
      %v1355 = vpop.f32.mrf.mxu0
      %v1356 = vadd.f32 %v1258, %v1355
      %1357 = vdwg.mxu0
      %1358 = vmatpush.msra.mxu0 0.0
      %1359 = vmatpush.msra.mxu0 0.0
      %1360 = vmatpush.msra.mxu0 0.0
      %1361 = vmatpush.msra.mxu0 0.0
      %1362 = vmatpush.msra.mxu0 0.0
      %1363 = vmatpush.msra.mxu0 0.0
      %1364 = vmatpush.msra.mxu0 0.0
      %1365 = vmatpush.msra.mxu0 0.0
      %1366 = vmatpush.msra.mxu0 0.0
      %1367 = vmatpush.msra.mxu0 0.0
      %1368 = vmatpush.msra.mxu0 0.0
      %1369 = vmatpush.msra.mxu0 0.0
      %1370 = vmatpush.msra.mxu0 0.0
      %1371 = vmatpush.msra.mxu0 0.0
      %1372 = vmatpush.msra.mxu0 0.0
      %1373 = vmatpush.msra.mxu0 %v1296
      %1374 = vmatmul.f32.gmra.mxu0 %v1288
      %v1375 = vpop.f32.mrf.mxu0
      %v1376 = vadd.f32 %v1278, %v1375
      %1377 = vdwg.mxu0
      %v1378 = vadd.f32 %v1316, %v342
      %v1379 = vadd.f32 %v1336, %v343
      %v1380 = vadd.f32 %v1356, %v344
      %v1381 = vadd.f32 %v1376, %v345
      %v1382 = vxor.u32 %v1378, 2147483648
      %v1383 = vmul.f32 %v1382, 1.442695
      %v1384 = vpow.pop %v1383
      %v1385 = vadd.f32 %v1384, 1.0
      %v1386 = vrcp.pop %v1385
      %v1387 = vmul.f32 %v1385, %v1386
      %v1388 = vsub.f32 1.0, %v1387
      %v1389 = vmul.f32 %v1386, %v1388
      %v1390 = vadd.f32 %v1386, %v1389
      %vm1391 = vweird.f32 %v1385
      %vm1392 = vweird.f32 %v1386
      %vm1393 = vmor %vm1391, %vm1392
      %v1394 = vsel %vm1393, %v1386, %v1390
      %v1395 = vand.u32 2147483647, %v1385
      %vm1396 = vcmp.eq.f32.partialorder %v1395, 8.507059e+37
      %v1397 = vand.u32 %v1385, 2147483648
      %v1398 = vor.u32 1.1754944e-38, %v1397
      %v1399 = vsel %vm1396, %v1398, %v1394
      %v1400 = vmul.f32 1.0, %v1399
      %v1401 = vxor.u32 %v1379, 2147483648
      %v1402 = vmul.f32 %v1401, 1.442695
      %v1403 = vpow.pop %v1402
      %v1404 = vadd.f32 %v1403, 1.0
      %v1405 = vrcp.pop %v1404
      %v1406 = vmul.f32 %v1404, %v1405
      %v1407 = vsub.f32 1.0, %v1406
      %v1408 = vmul.f32 %v1405, %v1407
      %v1409 = vadd.f32 %v1405, %v1408
      %vm1410 = vweird.f32 %v1404
      %vm1411 = vweird.f32 %v1405
      %vm1412 = vmor %vm1410, %vm1411
      %v1413 = vsel %vm1412, %v1405, %v1409
      %v1414 = vand.u32 2147483647, %v1404
      %vm1415 = vcmp.eq.f32.partialorder %v1414, 8.507059e+37
      %v1416 = vand.u32 %v1404, 2147483648
      %v1417 = vor.u32 1.1754944e-38, %v1416
      %v1418 = vsel %vm1415, %v1417, %v1413
      %v1419 = vmul.f32 1.0, %v1418
      %v1420 = vtanh.pop %v1380
      %v1421 = vxor.u32 %v1381, 2147483648
      %v1422 = vmul.f32 %v1421, 1.442695
      %v1423 = vpow.pop %v1422
      %v1424 = vadd.f32 %v1423, 1.0
      %v1425 = vrcp.pop %v1424
      %v1426 = vmul.f32 %v1424, %v1425
      %v1427 = vsub.f32 1.0, %v1426
      %v1428 = vmul.f32 %v1425, %v1427
      %v1429 = vadd.f32 %v1425, %v1428
      %vm1430 = vweird.f32 %v1424
      %vm1431 = vweird.f32 %v1425
      %vm1432 = vmor %vm1430, %vm1431
      %v1433 = vsel %vm1432, %v1425, %v1429
      %v1434 = vand.u32 2147483647, %v1424
      %vm1435 = vcmp.eq.f32.partialorder %v1434, 8.507059e+37
      %v1436 = vand.u32 %v1424, 2147483648
      %v1437 = vor.u32 1.1754944e-38, %v1436
      %v1438 = vsel %vm1435, %v1437, %v1433
      %v1439 = vmul.f32 1.0, %v1438
      %v1440 = vmul.f32 %v1419, %v1196
      %v1441 = vmul.f32 %v1400, %v1420
      %v1442 = vadd.f32 %v1440, %v1441
      %v1443 = vtanh.pop %v1442
      %v1444 = vmul.f32 %v1439, %v1443
      %v1445 = vstv %s1197
      %vm1446 = vcmp.lt.s32.totalorder %v1445, %v87
      %v1447 = vsel %vm1446, 1, 0
      %1448 = vset.pattern.permute.xlu0 0
      %1449 = vperm.xlu0 %1448, %v1447
      %v1450 = vpop.permute.xlu0 %1449
      %vm1451 = vcmp.eq.s32.totalorder %v1450, 1
      %v1452 = vsel %vm1451, %v1444, %v1195
      %v1453 = vsel %vm1451, %v1442, %v1196
      %s1454 = sadd.s32 %s91, 5
      %s1455 = scalar_lea.vmem %s70, 10
      %v1456 = vld [vmem:[%s1455] sm:$0x3]
      %1457 = vmatpush.msra.mxu0 %v155
      %1458 = vmatpush.msra.mxu0 %v151
      %1459 = vmatpush.msra.mxu0 %v147
      %1460 = vmatpush.msra.mxu0 %v143
      %1461 = vmatpush.msra.mxu0 %v139
      %1462 = vmatpush.msra.mxu0 %v135
      %1463 = vmatpush.msra.mxu0 %v131
      %1464 = vmatpush.msra.mxu0 %v127
      %1465 = vmatpush.msra.mxu0 %v123
      %1466 = vmatpush.msra.mxu0 %v119
      %1467 = vmatpush.msra.mxu0 %v115
      %1468 = vmatpush.msra.mxu0 %v111
      %1469 = vmatpush.msra.mxu0 %v107
      %1470 = vmatpush.msra.mxu0 %v103
      %1471 = vmatpush.msra.mxu0 %v99
      %1472 = vmatpush.msra.mxu0 %v95
      %1473 = vmatmul.f32.gmra.mxu0 %v1452
      %v1474 = vpop.f32.mrf.mxu0
      %v1475 = vadd.f32 0.0, %v1474
      %1476 = vdwg.mxu0
      %1477 = vmatpush.msra.mxu0 %v156
      %1478 = vmatpush.msra.mxu0 %v152
      %1479 = vmatpush.msra.mxu0 %v148
      %1480 = vmatpush.msra.mxu0 %v144
      %1481 = vmatpush.msra.mxu0 %v140
      %1482 = vmatpush.msra.mxu0 %v136
      %1483 = vmatpush.msra.mxu0 %v132
      %1484 = vmatpush.msra.mxu0 %v128
      %1485 = vmatpush.msra.mxu0 %v124
      %1486 = vmatpush.msra.mxu0 %v120
      %1487 = vmatpush.msra.mxu0 %v116
      %1488 = vmatpush.msra.mxu0 %v112
      %1489 = vmatpush.msra.mxu0 %v108
      %1490 = vmatpush.msra.mxu0 %v104
      %1491 = vmatpush.msra.mxu0 %v100
      %1492 = vmatpush.msra.mxu0 %v96
      %1493 = vmatmul.f32.gmra.mxu0 %v1452
      %v1494 = vpop.f32.mrf.mxu0
      %v1495 = vadd.f32 0.0, %v1494
      %1496 = vdwg.mxu0
      %1497 = vmatpush.msra.mxu0 %v157
      %1498 = vmatpush.msra.mxu0 %v153
      %1499 = vmatpush.msra.mxu0 %v149
      %1500 = vmatpush.msra.mxu0 %v145
      %1501 = vmatpush.msra.mxu0 %v141
      %1502 = vmatpush.msra.mxu0 %v137
      %1503 = vmatpush.msra.mxu0 %v133
      %1504 = vmatpush.msra.mxu0 %v129
      %1505 = vmatpush.msra.mxu0 %v125
      %1506 = vmatpush.msra.mxu0 %v121
      %1507 = vmatpush.msra.mxu0 %v117
      %1508 = vmatpush.msra.mxu0 %v113
      %1509 = vmatpush.msra.mxu0 %v109
      %1510 = vmatpush.msra.mxu0 %v105
      %1511 = vmatpush.msra.mxu0 %v101
      %1512 = vmatpush.msra.mxu0 %v97
      %1513 = vmatmul.f32.gmra.mxu0 %v1452
      %v1514 = vpop.f32.mrf.mxu0
      %v1515 = vadd.f32 0.0, %v1514
      %1516 = vdwg.mxu0
      %1517 = vmatpush.msra.mxu0 %v158
      %1518 = vmatpush.msra.mxu0 %v154
      %1519 = vmatpush.msra.mxu0 %v150
      %1520 = vmatpush.msra.mxu0 %v146
      %1521 = vmatpush.msra.mxu0 %v142
      %1522 = vmatpush.msra.mxu0 %v138
      %1523 = vmatpush.msra.mxu0 %v134
      %1524 = vmatpush.msra.mxu0 %v130
      %1525 = vmatpush.msra.mxu0 %v126
      %1526 = vmatpush.msra.mxu0 %v122
      %1527 = vmatpush.msra.mxu0 %v118
      %1528 = vmatpush.msra.mxu0 %v114
      %1529 = vmatpush.msra.mxu0 %v110
      %1530 = vmatpush.msra.mxu0 %v106
      %1531 = vmatpush.msra.mxu0 %v102
      %1532 = vmatpush.msra.mxu0 %v98
      %1533 = vmatmul.f32.gmra.mxu0 %v1452
      %v1534 = vpop.f32.mrf.mxu0
      %v1535 = vadd.f32 0.0, %v1534
      %1536 = vdwg.mxu0
      %1537 = vst [vmem:[#allocation1] ss:$2 sm:$0xff] %v93
      %s1538 = scalar_lea.vmem [#allocation1], 16
      %1539 = vst [vmem:[%s1538] ss:$2 sm:$0xff] %v94
      %v1540 = vld.sshfl [vmem:[#allocation1] sm:$0xff pattern:$0x75316420]
      %v1541 = vld.sshfl [vmem:[#allocation1 + $0x8] sm:$0xff pattern:$0x75316420]
      %v1542 = vld.sshfl [vmem:[#allocation1 + $0x10] sm:$0xff pattern:$0x75316420]
      %v1543 = vld.sshfl [vmem:[#allocation1 + $0x18] sm:$0xff pattern:$0x75316420]
      %v1545 = vsel %vm248, %v1456, 0
      %v1547 = vsel %vm252, %v1540, 0
      %v1549 = vsel %vm252, %v1541, 0
      %v1551 = vsel %vm252, %v1542, 0
      %v1553 = vsel %vm252, %v1543, 0
      %1555 = vmatpush.msra.mxu0 0.0
      %1556 = vmatpush.msra.mxu0 0.0
      %1557 = vmatpush.msra.mxu0 0.0
      %1558 = vmatpush.msra.mxu0 0.0
      %1559 = vmatpush.msra.mxu0 0.0
      %1560 = vmatpush.msra.mxu0 0.0
      %1561 = vmatpush.msra.mxu0 0.0
      %1562 = vmatpush.msra.mxu0 0.0
      %1563 = vmatpush.msra.mxu0 0.0
      %1564 = vmatpush.msra.mxu0 0.0
      %1565 = vmatpush.msra.mxu0 0.0
      %1566 = vmatpush.msra.mxu0 0.0
      %1567 = vmatpush.msra.mxu0 0.0
      %1568 = vmatpush.msra.mxu0 0.0
      %1569 = vmatpush.msra.mxu0 0.0
      %1570 = vmatpush.msra.mxu0 %v1547
      %1571 = vmatmul.f32.gmra.mxu0 %v1545
      %v1572 = vpop.f32.mrf.mxu0
      %v1573 = vadd.f32 %v1475, %v1572
      %1574 = vdwg.mxu0
      %1575 = vmatpush.msra.mxu0 0.0
      %1576 = vmatpush.msra.mxu0 0.0
      %1577 = vmatpush.msra.mxu0 0.0
      %1578 = vmatpush.msra.mxu0 0.0
      %1579 = vmatpush.msra.mxu0 0.0
      %1580 = vmatpush.msra.mxu0 0.0
      %1581 = vmatpush.msra.mxu0 0.0
      %1582 = vmatpush.msra.mxu0 0.0
      %1583 = vmatpush.msra.mxu0 0.0
      %1584 = vmatpush.msra.mxu0 0.0
      %1585 = vmatpush.msra.mxu0 0.0
      %1586 = vmatpush.msra.mxu0 0.0
      %1587 = vmatpush.msra.mxu0 0.0
      %1588 = vmatpush.msra.mxu0 0.0
      %1589 = vmatpush.msra.mxu0 0.0
      %1590 = vmatpush.msra.mxu0 %v1549
      %1591 = vmatmul.f32.gmra.mxu0 %v1545
      %v1592 = vpop.f32.mrf.mxu0
      %v1593 = vadd.f32 %v1495, %v1592
      %1594 = vdwg.mxu0
      %1595 = vmatpush.msra.mxu0 0.0
      %1596 = vmatpush.msra.mxu0 0.0
      %1597 = vmatpush.msra.mxu0 0.0
      %1598 = vmatpush.msra.mxu0 0.0
      %1599 = vmatpush.msra.mxu0 0.0
      %1600 = vmatpush.msra.mxu0 0.0
      %1601 = vmatpush.msra.mxu0 0.0
      %1602 = vmatpush.msra.mxu0 0.0
      %1603 = vmatpush.msra.mxu0 0.0
      %1604 = vmatpush.msra.mxu0 0.0
      %1605 = vmatpush.msra.mxu0 0.0
      %1606 = vmatpush.msra.mxu0 0.0
      %1607 = vmatpush.msra.mxu0 0.0
      %1608 = vmatpush.msra.mxu0 0.0
      %1609 = vmatpush.msra.mxu0 0.0
      %1610 = vmatpush.msra.mxu0 %v1551
      %1611 = vmatmul.f32.gmra.mxu0 %v1545
      %v1612 = vpop.f32.mrf.mxu0
      %v1613 = vadd.f32 %v1515, %v1612
      %1614 = vdwg.mxu0
      %1615 = vmatpush.msra.mxu0 0.0
      %1616 = vmatpush.msra.mxu0 0.0
      %1617 = vmatpush.msra.mxu0 0.0
      %1618 = vmatpush.msra.mxu0 0.0
      %1619 = vmatpush.msra.mxu0 0.0
      %1620 = vmatpush.msra.mxu0 0.0
      %1621 = vmatpush.msra.mxu0 0.0
      %1622 = vmatpush.msra.mxu0 0.0
      %1623 = vmatpush.msra.mxu0 0.0
      %1624 = vmatpush.msra.mxu0 0.0
      %1625 = vmatpush.msra.mxu0 0.0
      %1626 = vmatpush.msra.mxu0 0.0
      %1627 = vmatpush.msra.mxu0 0.0
      %1628 = vmatpush.msra.mxu0 0.0
      %1629 = vmatpush.msra.mxu0 0.0
      %1630 = vmatpush.msra.mxu0 %v1553
      %1631 = vmatmul.f32.gmra.mxu0 %v1545
      %v1632 = vpop.f32.mrf.mxu0
      %v1633 = vadd.f32 %v1535, %v1632
      %1634 = vdwg.mxu0
      %v1635 = vadd.f32 %v1573, %v342
      %v1636 = vadd.f32 %v1593, %v343
      %v1637 = vadd.f32 %v1613, %v344
      %v1638 = vadd.f32 %v1633, %v345
      %v1639 = vxor.u32 %v1635, 2147483648
      %v1640 = vmul.f32 %v1639, 1.442695
      %v1641 = vpow.pop %v1640
      %v1642 = vadd.f32 %v1641, 1.0
      %v1643 = vrcp.pop %v1642
      %v1644 = vmul.f32 %v1642, %v1643
      %v1645 = vsub.f32 1.0, %v1644
      %v1646 = vmul.f32 %v1643, %v1645
      %v1647 = vadd.f32 %v1643, %v1646
      %vm1648 = vweird.f32 %v1642
      %vm1649 = vweird.f32 %v1643
      %vm1650 = vmor %vm1648, %vm1649
      %v1651 = vsel %vm1650, %v1643, %v1647
      %v1652 = vand.u32 2147483647, %v1642
      %vm1653 = vcmp.eq.f32.partialorder %v1652, 8.507059e+37
      %v1654 = vand.u32 %v1642, 2147483648
      %v1655 = vor.u32 1.1754944e-38, %v1654
      %v1656 = vsel %vm1653, %v1655, %v1651
      %v1657 = vmul.f32 1.0, %v1656
      %v1658 = vxor.u32 %v1636, 2147483648
      %v1659 = vmul.f32 %v1658, 1.442695
      %v1660 = vpow.pop %v1659
      %v1661 = vadd.f32 %v1660, 1.0
      %v1662 = vrcp.pop %v1661
      %v1663 = vmul.f32 %v1661, %v1662
      %v1664 = vsub.f32 1.0, %v1663
      %v1665 = vmul.f32 %v1662, %v1664
      %v1666 = vadd.f32 %v1662, %v1665
      %vm1667 = vweird.f32 %v1661
      %vm1668 = vweird.f32 %v1662
      %vm1669 = vmor %vm1667, %vm1668
      %v1670 = vsel %vm1669, %v1662, %v1666
      %v1671 = vand.u32 2147483647, %v1661
      %vm1672 = vcmp.eq.f32.partialorder %v1671, 8.507059e+37
      %v1673 = vand.u32 %v1661, 2147483648
      %v1674 = vor.u32 1.1754944e-38, %v1673
      %v1675 = vsel %vm1672, %v1674, %v1670
      %v1676 = vmul.f32 1.0, %v1675
      %v1677 = vtanh.pop %v1637
      %v1678 = vxor.u32 %v1638, 2147483648
      %v1679 = vmul.f32 %v1678, 1.442695
      %v1680 = vpow.pop %v1679
      %v1681 = vadd.f32 %v1680, 1.0
      %v1682 = vrcp.pop %v1681
      %v1683 = vmul.f32 %v1681, %v1682
      %v1684 = vsub.f32 1.0, %v1683
      %v1685 = vmul.f32 %v1682, %v1684
      %v1686 = vadd.f32 %v1682, %v1685
      %vm1687 = vweird.f32 %v1681
      %vm1688 = vweird.f32 %v1682
      %vm1689 = vmor %vm1687, %vm1688
      %v1690 = vsel %vm1689, %v1682, %v1686
      %v1691 = vand.u32 2147483647, %v1681
      %vm1692 = vcmp.eq.f32.partialorder %v1691, 8.507059e+37
      %v1693 = vand.u32 %v1681, 2147483648
      %v1694 = vor.u32 1.1754944e-38, %v1693
      %v1695 = vsel %vm1692, %v1694, %v1690
      %v1696 = vmul.f32 1.0, %v1695
      %v1697 = vmul.f32 %v1676, %v1453
      %v1698 = vmul.f32 %v1657, %v1677
      %v1699 = vadd.f32 %v1697, %v1698
      %v1700 = vtanh.pop %v1699
      %v1701 = vmul.f32 %v1696, %v1700
      %v1702 = vstv %s1454
      %vm1703 = vcmp.lt.s32.totalorder %v1702, %v87
      %v1704 = vsel %vm1703, 1, 0
      %1705 = vset.pattern.permute.xlu0 0
      %1706 = vperm.xlu0 %1705, %v1704
      %v1707 = vpop.permute.xlu0 %1706
      %vm1708 = vcmp.eq.s32.totalorder %v1707, 1
      %v1709 = vsel %vm1708, %v1701, %v1452
      %v1710 = vsel %vm1708, %v1699, %v1453
      %s1711 = sadd.s32 %s91, 6
      %s1712 = scalar_lea.vmem %s70, 12
      %v1713 = vld [vmem:[%s1712] sm:$0x3]
      %1714 = vmatpush.msra.mxu0 %v155
      %1715 = vmatpush.msra.mxu0 %v151
      %1716 = vmatpush.msra.mxu0 %v147
      %1717 = vmatpush.msra.mxu0 %v143
      %1718 = vmatpush.msra.mxu0 %v139
      %1719 = vmatpush.msra.mxu0 %v135
      %1720 = vmatpush.msra.mxu0 %v131
      %1721 = vmatpush.msra.mxu0 %v127
      %1722 = vmatpush.msra.mxu0 %v123
      %1723 = vmatpush.msra.mxu0 %v119
      %1724 = vmatpush.msra.mxu0 %v115
      %1725 = vmatpush.msra.mxu0 %v111
      %1726 = vmatpush.msra.mxu0 %v107
      %1727 = vmatpush.msra.mxu0 %v103
      %1728 = vmatpush.msra.mxu0 %v99
      %1729 = vmatpush.msra.mxu0 %v95
      %1730 = vmatmul.f32.gmra.mxu0 %v1709
      %v1731 = vpop.f32.mrf.mxu0
      %v1732 = vadd.f32 0.0, %v1731
      %1733 = vdwg.mxu0
      %1734 = vmatpush.msra.mxu0 %v156
      %1735 = vmatpush.msra.mxu0 %v152
      %1736 = vmatpush.msra.mxu0 %v148
      %1737 = vmatpush.msra.mxu0 %v144
      %1738 = vmatpush.msra.mxu0 %v140
      %1739 = vmatpush.msra.mxu0 %v136
      %1740 = vmatpush.msra.mxu0 %v132
      %1741 = vmatpush.msra.mxu0 %v128
      %1742 = vmatpush.msra.mxu0 %v124
      %1743 = vmatpush.msra.mxu0 %v120
      %1744 = vmatpush.msra.mxu0 %v116
      %1745 = vmatpush.msra.mxu0 %v112
      %1746 = vmatpush.msra.mxu0 %v108
      %1747 = vmatpush.msra.mxu0 %v104
      %1748 = vmatpush.msra.mxu0 %v100
      %1749 = vmatpush.msra.mxu0 %v96
      %1750 = vmatmul.f32.gmra.mxu0 %v1709
      %v1751 = vpop.f32.mrf.mxu0
      %v1752 = vadd.f32 0.0, %v1751
      %1753 = vdwg.mxu0
      %1754 = vmatpush.msra.mxu0 %v157
      %1755 = vmatpush.msra.mxu0 %v153
      %1756 = vmatpush.msra.mxu0 %v149
      %1757 = vmatpush.msra.mxu0 %v145
      %1758 = vmatpush.msra.mxu0 %v141
      %1759 = vmatpush.msra.mxu0 %v137
      %1760 = vmatpush.msra.mxu0 %v133
      %1761 = vmatpush.msra.mxu0 %v129
      %1762 = vmatpush.msra.mxu0 %v125
      %1763 = vmatpush.msra.mxu0 %v121
      %1764 = vmatpush.msra.mxu0 %v117
      %1765 = vmatpush.msra.mxu0 %v113
      %1766 = vmatpush.msra.mxu0 %v109
      %1767 = vmatpush.msra.mxu0 %v105
      %1768 = vmatpush.msra.mxu0 %v101
      %1769 = vmatpush.msra.mxu0 %v97
      %1770 = vmatmul.f32.gmra.mxu0 %v1709
      %v1771 = vpop.f32.mrf.mxu0
      %v1772 = vadd.f32 0.0, %v1771
      %1773 = vdwg.mxu0
      %1774 = vmatpush.msra.mxu0 %v158
      %1775 = vmatpush.msra.mxu0 %v154
      %1776 = vmatpush.msra.mxu0 %v150
      %1777 = vmatpush.msra.mxu0 %v146
      %1778 = vmatpush.msra.mxu0 %v142
      %1779 = vmatpush.msra.mxu0 %v138
      %1780 = vmatpush.msra.mxu0 %v134
      %1781 = vmatpush.msra.mxu0 %v130
      %1782 = vmatpush.msra.mxu0 %v126
      %1783 = vmatpush.msra.mxu0 %v122
      %1784 = vmatpush.msra.mxu0 %v118
      %1785 = vmatpush.msra.mxu0 %v114
      %1786 = vmatpush.msra.mxu0 %v110
      %1787 = vmatpush.msra.mxu0 %v106
      %1788 = vmatpush.msra.mxu0 %v102
      %1789 = vmatpush.msra.mxu0 %v98
      %1790 = vmatmul.f32.gmra.mxu0 %v1709
      %v1791 = vpop.f32.mrf.mxu0
      %v1792 = vadd.f32 0.0, %v1791
      %1793 = vdwg.mxu0
      %1794 = vst [vmem:[#allocation1] ss:$2 sm:$0xff] %v93
      %s1795 = scalar_lea.vmem [#allocation1], 16
      %1796 = vst [vmem:[%s1795] ss:$2 sm:$0xff] %v94
      %v1797 = vld.sshfl [vmem:[#allocation1] sm:$0xff pattern:$0x75316420]
      %v1798 = vld.sshfl [vmem:[#allocation1 + $0x8] sm:$0xff pattern:$0x75316420]
      %v1799 = vld.sshfl [vmem:[#allocation1 + $0x10] sm:$0xff pattern:$0x75316420]
      %v1800 = vld.sshfl [vmem:[#allocation1 + $0x18] sm:$0xff pattern:$0x75316420]
      %v1802 = vsel %vm248, %v1713, 0
      %v1804 = vsel %vm252, %v1797, 0
      %v1806 = vsel %vm252, %v1798, 0
      %v1808 = vsel %vm252, %v1799, 0
      %v1810 = vsel %vm252, %v1800, 0
      %1812 = vmatpush.msra.mxu0 0.0
      %1813 = vmatpush.msra.mxu0 0.0
      %1814 = vmatpush.msra.mxu0 0.0
      %1815 = vmatpush.msra.mxu0 0.0
      %1816 = vmatpush.msra.mxu0 0.0
      %1817 = vmatpush.msra.mxu0 0.0
      %1818 = vmatpush.msra.mxu0 0.0
      %1819 = vmatpush.msra.mxu0 0.0
      %1820 = vmatpush.msra.mxu0 0.0
      %1821 = vmatpush.msra.mxu0 0.0
      %1822 = vmatpush.msra.mxu0 0.0
      %1823 = vmatpush.msra.mxu0 0.0
      %1824 = vmatpush.msra.mxu0 0.0
      %1825 = vmatpush.msra.mxu0 0.0
      %1826 = vmatpush.msra.mxu0 0.0
      %1827 = vmatpush.msra.mxu0 %v1804
      %1828 = vmatmul.f32.gmra.mxu0 %v1802
      %v1829 = vpop.f32.mrf.mxu0
      %v1830 = vadd.f32 %v1732, %v1829
      %1831 = vdwg.mxu0
      %1832 = vmatpush.msra.mxu0 0.0
      %1833 = vmatpush.msra.mxu0 0.0
      %1834 = vmatpush.msra.mxu0 0.0
      %1835 = vmatpush.msra.mxu0 0.0
      %1836 = vmatpush.msra.mxu0 0.0
      %1837 = vmatpush.msra.mxu0 0.0
      %1838 = vmatpush.msra.mxu0 0.0
      %1839 = vmatpush.msra.mxu0 0.0
      %1840 = vmatpush.msra.mxu0 0.0
      %1841 = vmatpush.msra.mxu0 0.0
      %1842 = vmatpush.msra.mxu0 0.0
      %1843 = vmatpush.msra.mxu0 0.0
      %1844 = vmatpush.msra.mxu0 0.0
      %1845 = vmatpush.msra.mxu0 0.0
      %1846 = vmatpush.msra.mxu0 0.0
      %1847 = vmatpush.msra.mxu0 %v1806
      %1848 = vmatmul.f32.gmra.mxu0 %v1802
      %v1849 = vpop.f32.mrf.mxu0
      %v1850 = vadd.f32 %v1752, %v1849
      %1851 = vdwg.mxu0
      %1852 = vmatpush.msra.mxu0 0.0
      %1853 = vmatpush.msra.mxu0 0.0
      %1854 = vmatpush.msra.mxu0 0.0
      %1855 = vmatpush.msra.mxu0 0.0
      %1856 = vmatpush.msra.mxu0 0.0
      %1857 = vmatpush.msra.mxu0 0.0
      %1858 = vmatpush.msra.mxu0 0.0
      %1859 = vmatpush.msra.mxu0 0.0
      %1860 = vmatpush.msra.mxu0 0.0
      %1861 = vmatpush.msra.mxu0 0.0
      %1862 = vmatpush.msra.mxu0 0.0
      %1863 = vmatpush.msra.mxu0 0.0
      %1864 = vmatpush.msra.mxu0 0.0
      %1865 = vmatpush.msra.mxu0 0.0
      %1866 = vmatpush.msra.mxu0 0.0
      %1867 = vmatpush.msra.mxu0 %v1808
      %1868 = vmatmul.f32.gmra.mxu0 %v1802
      %v1869 = vpop.f32.mrf.mxu0
      %v1870 = vadd.f32 %v1772, %v1869
      %1871 = vdwg.mxu0
      %1872 = vmatpush.msra.mxu0 0.0
      %1873 = vmatpush.msra.mxu0 0.0
      %1874 = vmatpush.msra.mxu0 0.0
      %1875 = vmatpush.msra.mxu0 0.0
      %1876 = vmatpush.msra.mxu0 0.0
      %1877 = vmatpush.msra.mxu0 0.0
      %1878 = vmatpush.msra.mxu0 0.0
      %1879 = vmatpush.msra.mxu0 0.0
      %1880 = vmatpush.msra.mxu0 0.0
      %1881 = vmatpush.msra.mxu0 0.0
      %1882 = vmatpush.msra.mxu0 0.0
      %1883 = vmatpush.msra.mxu0 0.0
      %1884 = vmatpush.msra.mxu0 0.0
      %1885 = vmatpush.msra.mxu0 0.0
      %1886 = vmatpush.msra.mxu0 0.0
      %1887 = vmatpush.msra.mxu0 %v1810
      %1888 = vmatmul.f32.gmra.mxu0 %v1802
      %v1889 = vpop.f32.mrf.mxu0
      %v1890 = vadd.f32 %v1792, %v1889
      %1891 = vdwg.mxu0
      %v1892 = vadd.f32 %v1830, %v342
      %v1893 = vadd.f32 %v1850, %v343
      %v1894 = vadd.f32 %v1870, %v344
      %v1895 = vadd.f32 %v1890, %v345
      %v1896 = vxor.u32 %v1892, 2147483648
      %v1897 = vmul.f32 %v1896, 1.442695
      %v1898 = vpow.pop %v1897
      %v1899 = vadd.f32 %v1898, 1.0
      %v1900 = vrcp.pop %v1899
      %v1901 = vmul.f32 %v1899, %v1900
      %v1902 = vsub.f32 1.0, %v1901
      %v1903 = vmul.f32 %v1900, %v1902
      %v1904 = vadd.f32 %v1900, %v1903
      %vm1905 = vweird.f32 %v1899
      %vm1906 = vweird.f32 %v1900
      %vm1907 = vmor %vm1905, %vm1906
      %v1908 = vsel %vm1907, %v1900, %v1904
      %v1909 = vand.u32 2147483647, %v1899
      %vm1910 = vcmp.eq.f32.partialorder %v1909, 8.507059e+37
      %v1911 = vand.u32 %v1899, 2147483648
      %v1912 = vor.u32 1.1754944e-38, %v1911
      %v1913 = vsel %vm1910, %v1912, %v1908
      %v1914 = vmul.f32 1.0, %v1913
      %v1915 = vxor.u32 %v1893, 2147483648
      %v1916 = vmul.f32 %v1915, 1.442695
      %v1917 = vpow.pop %v1916
      %v1918 = vadd.f32 %v1917, 1.0
      %v1919 = vrcp.pop %v1918
      %v1920 = vmul.f32 %v1918, %v1919
      %v1921 = vsub.f32 1.0, %v1920
      %v1922 = vmul.f32 %v1919, %v1921
      %v1923 = vadd.f32 %v1919, %v1922
      %vm1924 = vweird.f32 %v1918
      %vm1925 = vweird.f32 %v1919
      %vm1926 = vmor %vm1924, %vm1925
      %v1927 = vsel %vm1926, %v1919, %v1923
      %v1928 = vand.u32 2147483647, %v1918
      %vm1929 = vcmp.eq.f32.partialorder %v1928, 8.507059e+37
      %v1930 = vand.u32 %v1918, 2147483648
      %v1931 = vor.u32 1.1754944e-38, %v1930
      %v1932 = vsel %vm1929, %v1931, %v1927
      %v1933 = vmul.f32 1.0, %v1932
      %v1934 = vtanh.pop %v1894
      %v1935 = vxor.u32 %v1895, 2147483648
      %v1936 = vmul.f32 %v1935, 1.442695
      %v1937 = vpow.pop %v1936
      %v1938 = vadd.f32 %v1937, 1.0
      %v1939 = vrcp.pop %v1938
      %v1940 = vmul.f32 %v1938, %v1939
      %v1941 = vsub.f32 1.0, %v1940
      %v1942 = vmul.f32 %v1939, %v1941
      %v1943 = vadd.f32 %v1939, %v1942
      %vm1944 = vweird.f32 %v1938
      %vm1945 = vweird.f32 %v1939
      %vm1946 = vmor %vm1944, %vm1945
      %v1947 = vsel %vm1946, %v1939, %v1943
      %v1948 = vand.u32 2147483647, %v1938
      %vm1949 = vcmp.eq.f32.partialorder %v1948, 8.507059e+37
      %v1950 = vand.u32 %v1938, 2147483648
      %v1951 = vor.u32 1.1754944e-38, %v1950
      %v1952 = vsel %vm1949, %v1951, %v1947
      %v1953 = vmul.f32 1.0, %v1952
      %v1954 = vmul.f32 %v1933, %v1710
      %v1955 = vmul.f32 %v1914, %v1934
      %v1956 = vadd.f32 %v1954, %v1955
      %v1957 = vtanh.pop %v1956
      %v1958 = vmul.f32 %v1953, %v1957
      %v1959 = vstv %s1711
      %vm1960 = vcmp.lt.s32.totalorder %v1959, %v87
      %v1961 = vsel %vm1960, 1, 0
      %1962 = vset.pattern.permute.xlu0 0
      %1963 = vperm.xlu0 %1962, %v1961
      %v1964 = vpop.permute.xlu0 %1963
      %vm1965 = vcmp.eq.s32.totalorder %v1964, 1
      %v1966 = vsel %vm1965, %v1958, %v1709
      %v1967 = vsel %vm1965, %v1956, %v1710
      %s1968 = sadd.s32 %s91, 7
      %s1969 = scalar_lea.vmem %s70, 14
      %v1970 = vld [vmem:[%s1969] sm:$0x3]
      %1971 = vmatpush.msra.mxu0 %v155
      %1972 = vmatpush.msra.mxu0 %v151
      %1973 = vmatpush.msra.mxu0 %v147
      %1974 = vmatpush.msra.mxu0 %v143
      %1975 = vmatpush.msra.mxu0 %v139
      %1976 = vmatpush.msra.mxu0 %v135
      %1977 = vmatpush.msra.mxu0 %v131
      %1978 = vmatpush.msra.mxu0 %v127
      %1979 = vmatpush.msra.mxu0 %v123
      %1980 = vmatpush.msra.mxu0 %v119
      %1981 = vmatpush.msra.mxu0 %v115
      %1982 = vmatpush.msra.mxu0 %v111
      %1983 = vmatpush.msra.mxu0 %v107
      %1984 = vmatpush.msra.mxu0 %v103
      %1985 = vmatpush.msra.mxu0 %v99
      %1986 = vmatpush.msra.mxu0 %v95
      %1987 = vmatmul.f32.gmra.mxu0 %v1966
      %v1988 = vpop.f32.mrf.mxu0
      %v1989 = vadd.f32 0.0, %v1988
      %1990 = vdwg.mxu0
      %1991 = vmatpush.msra.mxu0 %v156
      %1992 = vmatpush.msra.mxu0 %v152
      %1993 = vmatpush.msra.mxu0 %v148
      %1994 = vmatpush.msra.mxu0 %v144
      %1995 = vmatpush.msra.mxu0 %v140
      %1996 = vmatpush.msra.mxu0 %v136
      %1997 = vmatpush.msra.mxu0 %v132
      %1998 = vmatpush.msra.mxu0 %v128
      %1999 = vmatpush.msra.mxu0 %v124
      %2000 = vmatpush.msra.mxu0 %v120
      %2001 = vmatpush.msra.mxu0 %v116
      %2002 = vmatpush.msra.mxu0 %v112
      %2003 = vmatpush.msra.mxu0 %v108
      %2004 = vmatpush.msra.mxu0 %v104
      %2005 = vmatpush.msra.mxu0 %v100
      %2006 = vmatpush.msra.mxu0 %v96
      %2007 = vmatmul.f32.gmra.mxu0 %v1966
      %v2008 = vpop.f32.mrf.mxu0
      %v2009 = vadd.f32 0.0, %v2008
      %2010 = vdwg.mxu0
      %2011 = vmatpush.msra.mxu0 %v157
      %2012 = vmatpush.msra.mxu0 %v153
      %2013 = vmatpush.msra.mxu0 %v149
      %2014 = vmatpush.msra.mxu0 %v145
      %2015 = vmatpush.msra.mxu0 %v141
      %2016 = vmatpush.msra.mxu0 %v137
      %2017 = vmatpush.msra.mxu0 %v133
      %2018 = vmatpush.msra.mxu0 %v129
      %2019 = vmatpush.msra.mxu0 %v125
      %2020 = vmatpush.msra.mxu0 %v121
      %2021 = vmatpush.msra.mxu0 %v117
      %2022 = vmatpush.msra.mxu0 %v113
      %2023 = vmatpush.msra.mxu0 %v109
      %2024 = vmatpush.msra.mxu0 %v105
      %2025 = vmatpush.msra.mxu0 %v101
      %2026 = vmatpush.msra.mxu0 %v97
      %2027 = vmatmul.f32.gmra.mxu0 %v1966
      %v2028 = vpop.f32.mrf.mxu0
      %v2029 = vadd.f32 0.0, %v2028
      %2030 = vdwg.mxu0
      %2031 = vmatpush.msra.mxu0 %v158
      %2032 = vmatpush.msra.mxu0 %v154
      %2033 = vmatpush.msra.mxu0 %v150
      %2034 = vmatpush.msra.mxu0 %v146
      %2035 = vmatpush.msra.mxu0 %v142
      %2036 = vmatpush.msra.mxu0 %v138
      %2037 = vmatpush.msra.mxu0 %v134
      %2038 = vmatpush.msra.mxu0 %v130
      %2039 = vmatpush.msra.mxu0 %v126
      %2040 = vmatpush.msra.mxu0 %v122
      %2041 = vmatpush.msra.mxu0 %v118
      %2042 = vmatpush.msra.mxu0 %v114
      %2043 = vmatpush.msra.mxu0 %v110
      %2044 = vmatpush.msra.mxu0 %v106
      %2045 = vmatpush.msra.mxu0 %v102
      %2046 = vmatpush.msra.mxu0 %v98
      %2047 = vmatmul.f32.gmra.mxu0 %v1966
      %v2048 = vpop.f32.mrf.mxu0
      %v2049 = vadd.f32 0.0, %v2048
      %2050 = vdwg.mxu0
      %2051 = vst [vmem:[#allocation1] ss:$2 sm:$0xff] %v93
      %s2052 = scalar_lea.vmem [#allocation1], 16
      %2053 = vst [vmem:[%s2052] ss:$2 sm:$0xff] %v94
      %v2054 = vld.sshfl [vmem:[#allocation1] sm:$0xff pattern:$0x75316420]
      %v2055 = vld.sshfl [vmem:[#allocation1 + $0x8] sm:$0xff pattern:$0x75316420]
      %v2056 = vld.sshfl [vmem:[#allocation1 + $0x10] sm:$0xff pattern:$0x75316420]
      %v2057 = vld.sshfl [vmem:[#allocation1 + $0x18] sm:$0xff pattern:$0x75316420]
      %v2059 = vsel %vm248, %v1970, 0
      %v2061 = vsel %vm252, %v2054, 0
      %v2063 = vsel %vm252, %v2055, 0
      %v2065 = vsel %vm252, %v2056, 0
      %v2067 = vsel %vm252, %v2057, 0
      %2069 = vmatpush.msra.mxu0 0.0
      %2070 = vmatpush.msra.mxu0 0.0
      %2071 = vmatpush.msra.mxu0 0.0
      %2072 = vmatpush.msra.mxu0 0.0
      %2073 = vmatpush.msra.mxu0 0.0
      %2074 = vmatpush.msra.mxu0 0.0
      %2075 = vmatpush.msra.mxu0 0.0
      %2076 = vmatpush.msra.mxu0 0.0
      %2077 = vmatpush.msra.mxu0 0.0
      %2078 = vmatpush.msra.mxu0 0.0
      %2079 = vmatpush.msra.mxu0 0.0
      %2080 = vmatpush.msra.mxu0 0.0
      %2081 = vmatpush.msra.mxu0 0.0
      %2082 = vmatpush.msra.mxu0 0.0
      %2083 = vmatpush.msra.mxu0 0.0
      %2084 = vmatpush.msra.mxu0 %v2061
      %2085 = vmatmul.f32.gmra.mxu0 %v2059
      %v2086 = vpop.f32.mrf.mxu0
      %v2087 = vadd.f32 %v1989, %v2086
      %2088 = vdwg.mxu0
      %2089 = vmatpush.msra.mxu0 0.0
      %2090 = vmatpush.msra.mxu0 0.0
      %2091 = vmatpush.msra.mxu0 0.0
      %2092 = vmatpush.msra.mxu0 0.0
      %2093 = vmatpush.msra.mxu0 0.0
      %2094 = vmatpush.msra.mxu0 0.0
      %2095 = vmatpush.msra.mxu0 0.0
      %2096 = vmatpush.msra.mxu0 0.0
      %2097 = vmatpush.msra.mxu0 0.0
      %2098 = vmatpush.msra.mxu0 0.0
      %2099 = vmatpush.msra.mxu0 0.0
      %2100 = vmatpush.msra.mxu0 0.0
      %2101 = vmatpush.msra.mxu0 0.0
      %2102 = vmatpush.msra.mxu0 0.0
      %2103 = vmatpush.msra.mxu0 0.0
      %2104 = vmatpush.msra.mxu0 %v2063
      %2105 = vmatmul.f32.gmra.mxu0 %v2059
      %v2106 = vpop.f32.mrf.mxu0
      %v2107 = vadd.f32 %v2009, %v2106
      %2108 = vdwg.mxu0
      %2109 = vmatpush.msra.mxu0 0.0
      %2110 = vmatpush.msra.mxu0 0.0
      %2111 = vmatpush.msra.mxu0 0.0
      %2112 = vmatpush.msra.mxu0 0.0
      %2113 = vmatpush.msra.mxu0 0.0
      %2114 = vmatpush.msra.mxu0 0.0
      %2115 = vmatpush.msra.mxu0 0.0
      %2116 = vmatpush.msra.mxu0 0.0
      %2117 = vmatpush.msra.mxu0 0.0
      %2118 = vmatpush.msra.mxu0 0.0
      %2119 = vmatpush.msra.mxu0 0.0
      %2120 = vmatpush.msra.mxu0 0.0
      %2121 = vmatpush.msra.mxu0 0.0
      %2122 = vmatpush.msra.mxu0 0.0
      %2123 = vmatpush.msra.mxu0 0.0
      %2124 = vmatpush.msra.mxu0 %v2065
      %2125 = vmatmul.f32.gmra.mxu0 %v2059
      %v2126 = vpop.f32.mrf.mxu0
      %v2127 = vadd.f32 %v2029, %v2126
      %2128 = vdwg.mxu0
      %2129 = vmatpush.msra.mxu0 0.0
      %2130 = vmatpush.msra.mxu0 0.0
      %2131 = vmatpush.msra.mxu0 0.0
      %2132 = vmatpush.msra.mxu0 0.0
      %2133 = vmatpush.msra.mxu0 0.0
      %2134 = vmatpush.msra.mxu0 0.0
      %2135 = vmatpush.msra.mxu0 0.0
      %2136 = vmatpush.msra.mxu0 0.0
      %2137 = vmatpush.msra.mxu0 0.0
      %2138 = vmatpush.msra.mxu0 0.0
      %2139 = vmatpush.msra.mxu0 0.0
      %2140 = vmatpush.msra.mxu0 0.0
      %2141 = vmatpush.msra.mxu0 0.0
      %2142 = vmatpush.msra.mxu0 0.0
      %2143 = vmatpush.msra.mxu0 0.0
      %2144 = vmatpush.msra.mxu0 %v2067
      %2145 = vmatmul.f32.gmra.mxu0 %v2059
      %v2146 = vpop.f32.mrf.mxu0
      %v2147 = vadd.f32 %v2049, %v2146
      %2148 = vdwg.mxu0
      %v2149 = vadd.f32 %v2087, %v342
      %v2150 = vadd.f32 %v2107, %v343
      %v2151 = vadd.f32 %v2127, %v344
      %v2152 = vadd.f32 %v2147, %v345
      %v2153 = vxor.u32 %v2149, 2147483648
      %v2154 = vmul.f32 %v2153, 1.442695
      %v2155 = vpow.pop %v2154
      %v2156 = vadd.f32 %v2155, 1.0
      %v2157 = vrcp.pop %v2156
      %v2158 = vmul.f32 %v2156, %v2157
      %v2159 = vsub.f32 1.0, %v2158
      %v2160 = vmul.f32 %v2157, %v2159
      %v2161 = vadd.f32 %v2157, %v2160
      %vm2162 = vweird.f32 %v2156
      %vm2163 = vweird.f32 %v2157
      %vm2164 = vmor %vm2162, %vm2163
      %v2165 = vsel %vm2164, %v2157, %v2161
      %v2166 = vand.u32 2147483647, %v2156
      %vm2167 = vcmp.eq.f32.partialorder %v2166, 8.507059e+37
      %v2168 = vand.u32 %v2156, 2147483648
      %v2169 = vor.u32 1.1754944e-38, %v2168
      %v2170 = vsel %vm2167, %v2169, %v2165
      %v2171 = vmul.f32 1.0, %v2170
      %v2172 = vxor.u32 %v2150, 2147483648
      %v2173 = vmul.f32 %v2172, 1.442695
      %v2174 = vpow.pop %v2173
      %v2175 = vadd.f32 %v2174, 1.0
      %v2176 = vrcp.pop %v2175
      %v2177 = vmul.f32 %v2175, %v2176
      %v2178 = vsub.f32 1.0, %v2177
      %v2179 = vmul.f32 %v2176, %v2178
      %v2180 = vadd.f32 %v2176, %v2179
      %vm2181 = vweird.f32 %v2175
      %vm2182 = vweird.f32 %v2176
      %vm2183 = vmor %vm2181, %vm2182
      %v2184 = vsel %vm2183, %v2176, %v2180
      %v2185 = vand.u32 2147483647, %v2175
      %vm2186 = vcmp.eq.f32.partialorder %v2185, 8.507059e+37
      %v2187 = vand.u32 %v2175, 2147483648
      %v2188 = vor.u32 1.1754944e-38, %v2187
      %v2189 = vsel %vm2186, %v2188, %v2184
      %v2190 = vmul.f32 1.0, %v2189
      %v2191 = vtanh.pop %v2151
      %v2192 = vxor.u32 %v2152, 2147483648
      %v2193 = vmul.f32 %v2192, 1.442695
      %v2194 = vpow.pop %v2193
      %v2195 = vadd.f32 %v2194, 1.0
      %v2196 = vrcp.pop %v2195
      %v2197 = vmul.f32 %v2195, %v2196
      %v2198 = vsub.f32 1.0, %v2197
      %v2199 = vmul.f32 %v2196, %v2198
      %v2200 = vadd.f32 %v2196, %v2199
      %vm2201 = vweird.f32 %v2195
      %vm2202 = vweird.f32 %v2196
      %vm2203 = vmor %vm2201, %vm2202
      %v2204 = vsel %vm2203, %v2196, %v2200
      %v2205 = vand.u32 2147483647, %v2195
      %vm2206 = vcmp.eq.f32.partialorder %v2205, 8.507059e+37
      %v2207 = vand.u32 %v2195, 2147483648
      %v2208 = vor.u32 1.1754944e-38, %v2207
      %v2209 = vsel %vm2206, %v2208, %v2204
      %v2210 = vmul.f32 1.0, %v2209
      %v2211 = vmul.f32 %v2190, %v1967
      %v2212 = vmul.f32 %v2171, %v2191
      %v2213 = vadd.f32 %v2211, %v2212
      %v2214 = vtanh.pop %v2213
      %v2215 = vmul.f32 %v2210, %v2214
      %v2216 = vstv %s1968
      %vm2217 = vcmp.lt.s32.totalorder %v2216, %v87
      %v2218 = vsel %vm2217, 1, 0
      %2219 = vset.pattern.permute.xlu0 0
      %2220 = vperm.xlu0 %2219, %v2218
      %v2221 = vpop.permute.xlu0 %2220
      %vm2222 = vcmp.eq.s32.totalorder %v2221, 1
      %v2223 = vsel %vm2222, %v2215, %v1966
      %v2224 = vsel %vm2222, %v2213, %v1967
      %2225 = vst [vmem:[#allocation2] sm:$0x3] %v2223
      %2226 = vst [vmem:[#allocation3] sm:$0x3] %v2224
    $region33: #{tpu_custom_call.1} parent=1 // pred_fallthru
      _
    // Predicated region
    $region34: #{tpu_custom_call.1} parent=1 // pred_check
      %p2227 = pneg %p76
    $region35: #{tpu_custom_call.1} parent=1 // pred_check_branch
      %2229 = sbr.rel (%p2227) target = $region37
    $region36: #{tpu_custom_call.1} parent=1 // pred_region
      %v2230 = vld [vmem:[#allocation2] sm:$0x3]
      %2231 = vst [vmem:[#allocation9] sm:$0x3] %v2230
    $region37: #{tpu_custom_call.1} parent=1 // pred_fallthru
      _
    // Predicated region
    $region38: #{tpu_custom_call.1} parent=1 // pred_check
      _
    $region39: #{tpu_custom_call.1} parent=1 // pred_check_branch
      %2233 = sbr.rel (0) target = $region41
    $region40: #{tpu_custom_call.1} parent=1 // pred_region
      %2235 = vsyncadd [#allocation8], 0
      %s2237 = sshll.u32 [#allocation9], 4
      %s2238 = int_to_ptr.vmem [resolvable:$true] %s2237
      %s2239 = sshll.u32 %s6, 4
      %s2240 = int_to_ptr.hbm [resolvable:$true] %s2239
      %2242 = dma.vmem_to_hbm [thread:$0]  %s2238, 32, %s2240, [#allocation8]
    $region41: #{tpu_custom_call.1} parent=1 // pred_fallthru
      _
    // Predicated region
    $region42: #{tpu_custom_call.1} parent=1 // pred_check
      _
    $region43: #{tpu_custom_call.1} parent=1 // pred_check_branch
      %2244 = sbr.rel (0) target = $region45
    $region44: #{tpu_custom_call.1} parent=1 // pred_region
      %2246 = dma.done [#allocation8], 32
    $region45: #{tpu_custom_call.1} parent=1 // pred_fallthru
      _
    %2247 = vsyncpa [#allocation7], 1
    %2248 = vsyncpa [#allocation8], 1

</llo_original>
